<compile_context>
chip_gen: v7x
topology: tpu7x:2x2x1
jax: 0.10.0
libtpu: 0.0.40
codegen_flags: <defaults>
</compile_context>

<pallas_src>
import jax
import jax.numpy as jnp
from jax.experimental import pallas as pl
from jax.experimental.pallas import tpu as pltpu


def _lstm_kernel(x_ref, wi_ref, wh_ref, b_ref, wfc_ref, bfc_ref,
                 out_ref, xg_scr):
    """Fused LSTM forward + output projection (single invocation, no grid).

    x_ref  : (T*Bp, I)   time-major input, batch zero-padded to Bp (mult of 8)
    wi_ref : (I, 4H)     gate order i, f, g, o (PyTorch convention);
                         g-columns pre-scaled by 2 in the wrapper
    wh_ref : (H, 4H)     g-columns pre-scaled by 2
    b_ref  : (1, 4H)     b_ih + b_hh combined; g-columns pre-scaled by 2
    wfc_ref: (1, H)      fc weight (transposed)
    bfc_ref: (1, 1)
    out_ref: (Bp, T)     y[b, t]
    xg_scr : (T*Bp, 4H)  VMEM scratch: precomputed x @ Wi + b
    """
    Bp, T = out_ref.shape
    H = wh_ref.shape[0]

    # ---- hoisted input projection: one MXU matmul, gate bias folded in ----
    # TODO(synk): K=4 MXU use + 4/128-lane input load; if it shows in the
    # startup epilogue, replace with 4 broadcast VPU multiply-adds.
    xg_scr[...] = (jnp.dot(x_ref[...], wi_ref[...],
                           preferred_element_type=jnp.float32)
                   + b_ref[...])

    # Lane mask for the "g" gate block (tanh via the sigmoid identity);
    # i/f/o lanes keep plain sigmoid.
    lane = jax.lax.broadcasted_iota(jnp.int32, (Bp, 4 * H), 1)
    g_mask = (lane >= 2 * H) & (lane < 3 * H)

    # Lane index over the (Bp, T) output accumulator (column == time step).
    t_lane = jax.lax.broadcasted_iota(jnp.int32, (Bp, T), 1)

    wh = wh_ref[...]
    wfc_row = wfc_ref[...]                                # (1, H)
    h = jnp.zeros((Bp, H), jnp.float32)
    c = jnp.zeros((Bp, H), jnp.float32)
    y_acc = jnp.zeros((Bp, T), jnp.float32)

    # ---- fully unrolled recurrence (T small & static) ----
    for t in range(T):
        xg_t = xg_scr[pl.ds(t * Bp, Bp), :]               # (Bp, 4H), static start
        gates = xg_t + jnp.dot(h, wh, preferred_element_type=jnp.float32)
        # one whole-vreg EUP sigmoid; tanh(g) = 2*sigmoid(2g) - 1 (g pre-scaled)
        s = jax.nn.sigmoid(gates)
        act = jnp.where(g_mask, 2.0 * s - 1.0, s)
        i_g = act[:, 0 * H:1 * H]
        f_g = act[:, 1 * H:2 * H]
        g_g = act[:, 2 * H:3 * H]
        o_g = act[:, 3 * H:4 * H]
        c = f_g * c + i_g * g_g
        h = o_g * jnp.tanh(c)
        # per-step fc (out dim = 1): VPU mul + XLU lane reduce, off critical path
        y_t = jnp.sum(h * wfc_row, axis=-1, keepdims=True)     # (Bp, 1)
        y_acc = jnp.where(t_lane == t, y_t, y_acc)             # place column t

    # ---- single lane-dense-as-possible store + fc bias ----
    out_ref[...] = y_acc + bfc_ref[...]


def lstm_wrapper_forward(u_in_f, params):
    """Matches LSTMWrapper.forward: y = net(u_in_f); return y.view(-1, 1).

    u_in_f: (B, T, I) float32 (batch_first, like the torch model).
    returns: (B*T, 1) float32.
    """
    wi, wh, b, wfc, bfc = params
    B, T, I = u_in_f.shape
    H = wh.shape[0]
    Bp = ((B + 7) // 8) * 8                       # pad batch to full sublane

    # Pre-scale the g-gate columns by 2 (trace-time, free) so the kernel can
    # use tanh(x) = 2*sigmoid(2x) - 1 with a single whole-vreg sigmoid.
    g_scale = jnp.concatenate([
        jnp.ones((2 * H,), jnp.float32),
        jnp.full((H,), 2.0, jnp.float32),
        jnp.ones((H,), jnp.float32),
    ])                                                            # (4H,)
    wi_s = wi * g_scale
    wh_s = wh * g_scale
    b_s = b * g_scale

    x_tm = jnp.transpose(u_in_f, (1, 0, 2))                       # (T, B, I)
    x_tm = jnp.pad(x_tm, ((0, 0), (0, Bp - B), (0, 0)))           # (T, Bp, I)
    x2d = x_tm.reshape(T * Bp, I)                                 # time-major rows
    wfc_t = jnp.transpose(wfc)                                    # (1, H)

    out = pl.pallas_call(
        _lstm_kernel,
        out_shape=jax.ShapeDtypeStruct((Bp, T), jnp.float32),
        scratch_shapes=[
            pltpu.VMEM((T * Bp, 4 * H), jnp.float32),   # precomputed x @ Wi + b
        ],
    )(x2d, wi_s, wh_s, b_s, wfc_t, bfc)                           # (Bp, T)

    return out[:B, :].reshape(-1, 1)                              # (B*T, 1)


def init_params(key, input_size, hidden_size):
    """Deterministic init (uniform(-1/sqrt(H), 1/sqrt(H)), PyTorch-style)."""
    k = 1.0 / jnp.sqrt(jnp.float32(hidden_size))
    keys = jax.random.split(key, 6)
    wi = jax.random.uniform(keys[0], (input_size, 4 * hidden_size),
                            jnp.float32, -k, k)
    wh = jax.random.uniform(keys[1], (hidden_size, 4 * hidden_size),
                            jnp.float32, -k, k)
    b_ih = jax.random.uniform(keys[2], (1, 4 * hidden_size), jnp.float32, -k, k)
    b_hh = jax.random.uniform(keys[3], (1, 4 * hidden_size), jnp.float32, -k, k)
    b = b_ih + b_hh
    wfc = jax.random.uniform(keys[4], (hidden_size, 1), jnp.float32, -k, k)
    bfc = jax.random.uniform(keys[5], (1, 1), jnp.float32, -k, k)
    return wi, wh, b, wfc, bfc


def reference_forward(u_in_f, params):
    """Pure-JAX reference (lax.scan LSTM) for correctness checking."""
    wi, wh, b, wfc, bfc = params
    B, T, I = u_in_f.shape
    H = wh.shape[0]
    x_tm = jnp.transpose(u_in_f, (1, 0, 2))

    def step(carry, x_t):
        h, c = carry
        gates = x_t @ wi + h @ wh + b
        i_g = jax.nn.sigmoid(gates[:, 0 * H:1 * H])
        f_g = jax.nn.sigmoid(gates[:, 1 * H:2 * H])
        g_g = jnp.tanh(gates[:, 2 * H:3 * H])
        o_g = jax.nn.sigmoid(gates[:, 3 * H:4 * H])
        c_new = f_g * c + i_g * g_g
        h_new = o_g * jnp.tanh(c_new)
        y_t = h_new @ wfc + bfc
        return (h_new, c_new), y_t

    init = (jnp.zeros((B, H), jnp.float32), jnp.zeros((B, H), jnp.float32))
    _, ys = jax.lax.scan(step, init, x_tm)                        # (T, B, 1)
    return jnp.transpose(ys, (1, 0, 2)).reshape(-1, 1)


if __name__ == "__main__":
    batch_s, seq_len, input_size, hidden_size = 2, 8, 4, 32

    key = jax.random.PRNGKey(0)
    k_x, k_p = jax.random.split(key)
    u_in_f = jax.random.normal(k_x, (batch_s, seq_len, input_size), jnp.float32)
    params = init_params(k_p, input_size, hidden_size)

    y = jax.block_until_ready(lstm_wrapper_forward(u_in_f, params))
    y_ref = jax.block_until_ready(reference_forward(u_in_f, params))

    assert y.shape == (batch_s * seq_len, 1), y.shape
    assert jnp.allclose(y, y_ref, atol=1e-4, rtol=1e-4), \
        float(jnp.max(jnp.abs(y - y_ref)))
    print("KERNEL_OK")
</pallas_src>

<mosaic_0001>
module attributes {stable_mosaic.version = 11 : i64} {
  func.func @_lstm_kernel(%arg0: memref<64x4xf32, #tpu.memory_space<vmem>>, %arg1: memref<4x128xf32, #tpu.memory_space<vmem>>, %arg2: memref<32x128xf32, #tpu.memory_space<vmem>>, %arg3: memref<1x128xf32, #tpu.memory_space<vmem>>, %arg4: memref<1x32xf32, #tpu.memory_space<vmem>>, %arg5: memref<1x1xf32, #tpu.memory_space<vmem>>, %arg6: memref<8x8xf32, #tpu.memory_space<vmem>>, %arg7: memref<64x128xf32, #tpu.memory_space<vmem>>) attributes {dimension_semantics = [], scalar_prefetch = 0 : i64, scratch_operands = 1 : i64, tpu.core_type = #tpu.core_type<tc>} {
    %c0 = arith.constant 0 : index
    %c0_0 = arith.constant 0 : index
    %0 = vector.load %arg0[%c0, %c0_0] : memref<64x4xf32, #tpu.memory_space<vmem>>, vector<64x4xf32>
    %c0_1 = arith.constant 0 : index
    %c0_2 = arith.constant 0 : index
    %1 = vector.load %arg1[%c0_1, %c0_2] : memref<4x128xf32, #tpu.memory_space<vmem>>, vector<4x128xf32>
    %cst = arith.constant dense<0.000000e+00> : vector<64x128xf32>
    %2 = tpu.matmul %0, %1, %cst {dimension_numbers = #tpu.dot_dimension_numbers<[1], [0], [0], [1], [0, 0, 1, 1], [], []>} : vector<64x4xf32>, vector<4x128xf32>, vector<64x128xf32> -> vector<64x128xf32>
    %c0_3 = arith.constant 0 : index
    %c0_4 = arith.constant 0 : index
    %3 = vector.load %arg3[%c0_3, %c0_4] : memref<1x128xf32, #tpu.memory_space<vmem>>, vector<1x128xf32>
    %4 = vector.broadcast %3 : vector<1x128xf32> to vector<64x128xf32>
    %5 = arith.addf %2, %4 : vector<64x128xf32>
    %c0_5 = arith.constant 0 : index
    %c0_6 = arith.constant 0 : index
    %6 = vector.load %arg7[%c0_5, %c0_6] : memref<64x128xf32, #tpu.memory_space<vmem>>, vector<64x128xf32>
    tpu.vector_store %arg7[%c0_5, %c0_6], %5 {strides = array<i32>} : memref<64x128xf32, #tpu.memory_space<vmem>>, vector<64x128xf32>,
    %7 = tpu.iota {dimensions = array<i32: 1>} : vector<8x128xi32>
    %c64_i32 = arith.constant 64 : i32
    %8 = vector.broadcast %c64_i32 : i32 to vector<8x128xi32>
    %9 = arith.cmpi sge, %7, %8 : vector<8x128xi32>
    %c96_i32 = arith.constant 96 : i32
    %10 = vector.broadcast %c96_i32 : i32 to vector<8x128xi32>
    %11 = arith.cmpi slt, %7, %10 : vector<8x128xi32>
    %12 = arith.andi %9, %11 : vector<8x128xi1>
    %13 = tpu.iota {dimensions = array<i32: 1>} : vector<8x8xi32>
    %c0_7 = arith.constant 0 : index
    %c0_8 = arith.constant 0 : index
    %14 = vector.load %arg2[%c0_7, %c0_8] : memref<32x128xf32, #tpu.memory_space<vmem>>, vector<32x128xf32>
    %c0_9 = arith.constant 0 : index
    %c0_10 = arith.constant 0 : index
    %15 = vector.load %arg4[%c0_9, %c0_10] : memref<1x32xf32, #tpu.memory_space<vmem>>, vector<1x32xf32>
    %cst_11 = arith.constant 0.000000e+00 : f32
    %16 = vector.broadcast %cst_11 : f32 to vector<8x32xf32>
    %cst_12 = arith.constant 0.000000e+00 : f32
    %17 = vector.broadcast %cst_12 : f32 to vector<8x32xf32>
    %cst_13 = arith.constant 0.000000e+00 : f32
    %18 = vector.broadcast %cst_13 : f32 to vector<8x8xf32>
    %c0_14 = arith.constant 0 : index
    %c0_15 = arith.constant 0 : index
    %19 = vector.load %arg7[%c0_14, %c0_15] : memref<64x128xf32, #tpu.memory_space<vmem>>, vector<8x128xf32>
    %cst_16 = arith.constant dense<0.000000e+00> : vector<8x128xf32>
    %20 = tpu.matmul %16, %14, %cst_16 {dimension_numbers = #tpu.dot_dimension_numbers<[1], [0], [0], [1], [0, 0, 1, 1], [], []>} : vector<8x32xf32>, vector<32x128xf32>, vector<8x128xf32> -> vector<8x128xf32>
    %21 = arith.addf %19, %20 : vector<8x128xf32>
    %22 = arith.negf %21 : vector<8x128xf32>
    %23 = math.exp %22 : vector<8x128xf32>
    %cst_17 = arith.constant 1.000000e+00 : f32
    %24 = vector.broadcast %cst_17 : f32 to vector<8x128xf32>
    %25 = arith.addf %24, %23 : vector<8x128xf32>
    %26 = arith.divf %24, %25 : vector<8x128xf32>
    %cst_18 = arith.constant 2.000000e+00 : f32
    %27 = vector.broadcast %cst_18 : f32 to vector<8x128xf32>
    %28 = arith.mulf %27, %26 : vector<8x128xf32>
    %cst_19 = arith.constant 1.000000e+00 : f32
    %29 = vector.broadcast %cst_19 : f32 to vector<8x128xf32>
    %30 = arith.subf %28, %29 : vector<8x128xf32>
    %31 = arith.select %12, %30, %26 : vector<8x128xi1>, vector<8x128xf32>
    %32 = vector.extract_strided_slice %31 {offsets = [0, 0], sizes = [8, 32], strides = [1, 1]} : vector<8x128xf32> to vector<8x32xf32>
    %33 = vector.extract_strided_slice %31 {offsets = [0, 32], sizes = [8, 32], strides = [1, 1]} : vector<8x128xf32> to vector<8x32xf32>
    %34 = vector.extract_strided_slice %31 {offsets = [0, 64], sizes = [8, 32], strides = [1, 1]} : vector<8x128xf32> to vector<8x32xf32>
    %35 = vector.extract_strided_slice %31 {offsets = [0, 96], sizes = [8, 32], strides = [1, 1]} : vector<8x128xf32> to vector<8x32xf32>
    %36 = arith.mulf %33, %17 : vector<8x32xf32>
    %37 = arith.mulf %32, %34 : vector<8x32xf32>
    %38 = arith.addf %36, %37 : vector<8x32xf32>
    %39 = math.tanh %38 : vector<8x32xf32>
    %40 = arith.mulf %35, %39 : vector<8x32xf32>
    %41 = vector.broadcast %15 : vector<1x32xf32> to vector<8x32xf32>
    %42 = arith.mulf %40, %41 : vector<8x32xf32>
    %cst_20 = arith.constant dense<0.000000e+00> : vector<8xf32>
    %43 = vector.multi_reduction <add>, %42, %cst_20 [1] : vector<8x32xf32> to vector<8xf32>
    %44 = vector.shape_cast %43 : vector<8xf32> to vector<8x1xf32>
    %c0_i32 = arith.constant 0 : i32
    %45 = vector.broadcast %c0_i32 : i32 to vector<8x8xi32>
    %46 = arith.cmpi eq, %13, %45 : vector<8x8xi32>
    %47 = vector.shape_cast %44 : vector<8x1xf32> to vector<8x1xf32>
    %48 = vector.broadcast %47 : vector<8x1xf32> to vector<8x8xf32>
    %49 = arith.select %46, %48, %18 : vector<8x8xi1>, vector<8x8xf32>
    %c8 = arith.constant 8 : index
    %c0_21 = arith.constant 0 : index
    %50 = vector.load %arg7[%c8, %c0_21] : memref<64x128xf32, #tpu.memory_space<vmem>>, vector<8x128xf32>
    %cst_22 = arith.constant dense<0.000000e+00> : vector<8x128xf32>
    %51 = tpu.matmul %40, %14, %cst_22 {dimension_numbers = #tpu.dot_dimension_numbers<[1], [0], [0], [1], [0, 0, 1, 1], [], []>} : vector<8x32xf32>, vector<32x128xf32>, vector<8x128xf32> -> vector<8x128xf32>
    %52 = arith.addf %50, %51 : vector<8x128xf32>
    %53 = arith.negf %52 : vector<8x128xf32>
    %54 = math.exp %53 : vector<8x128xf32>
    %cst_23 = arith.constant 1.000000e+00 : f32
    %55 = vector.broadcast %cst_23 : f32 to vector<8x128xf32>
    %56 = arith.addf %55, %54 : vector<8x128xf32>
    %57 = arith.divf %55, %56 : vector<8x128xf32>
    %cst_24 = arith.constant 2.000000e+00 : f32
    %58 = vector.broadcast %cst_24 : f32 to vector<8x128xf32>
    %59 = arith.mulf %58, %57 : vector<8x128xf32>
    %cst_25 = arith.constant 1.000000e+00 : f32
    %60 = vector.broadcast %cst_25 : f32 to vector<8x128xf32>
    %61 = arith.subf %59, %60 : vector<8x128xf32>
    %62 = arith.select %12, %61, %57 : vector<8x128xi1>, vector<8x128xf32>
    %63 = vector.extract_strided_slice %62 {offsets = [0, 0], sizes = [8, 32], strides = [1, 1]} : vector<8x128xf32> to vector<8x32xf32>
    %64 = vector.extract_strided_slice %62 {offsets = [0, 32], sizes = [8, 32], strides = [1, 1]} : vector<8x128xf32> to vector<8x32xf32>
    %65 = vector.extract_strided_slice %62 {offsets = [0, 64], sizes = [8, 32], strides = [1, 1]} : vector<8x128xf32> to vector<8x32xf32>
    %66 = vector.extract_strided_slice %62 {offsets = [0, 96], sizes = [8, 32], strides = [1, 1]} : vector<8x128xf32> to vector<8x32xf32>
    %67 = arith.mulf %64, %38 : vector<8x32xf32>
    %68 = arith.mulf %63, %65 : vector<8x32xf32>
    %69 = arith.addf %67, %68 : vector<8x32xf32>
    %70 = math.tanh %69 : vector<8x32xf32>
    %71 = arith.mulf %66, %70 : vector<8x32xf32>
    %72 = vector.broadcast %15 : vector<1x32xf32> to vector<8x32xf32>
    %73 = arith.mulf %71, %72 : vector<8x32xf32>
    %cst_26 = arith.constant dense<0.000000e+00> : vector<8xf32>
    %74 = vector.multi_reduction <add>, %73, %cst_26 [1] : vector<8x32xf32> to vector<8xf32>
    %75 = vector.shape_cast %74 : vector<8xf32> to vector<8x1xf32>
    %c1_i32 = arith.constant 1 : i32
    %76 = vector.broadcast %c1_i32 : i32 to vector<8x8xi32>
    %77 = arith.cmpi eq, %13, %76 : vector<8x8xi32>
    %78 = vector.shape_cast %75 : vector<8x1xf32> to vector<8x1xf32>
    %79 = vector.broadcast %78 : vector<8x1xf32> to vector<8x8xf32>
    %80 = arith.select %77, %79, %49 : vector<8x8xi1>, vector<8x8xf32>
    %c16 = arith.constant 16 : index
    %c0_27 = arith.constant 0 : index
    %81 = vector.load %arg7[%c16, %c0_27] : memref<64x128xf32, #tpu.memory_space<vmem>>, vector<8x128xf32>
    %cst_28 = arith.constant dense<0.000000e+00> : vector<8x128xf32>
    %82 = tpu.matmul %71, %14, %cst_28 {dimension_numbers = #tpu.dot_dimension_numbers<[1], [0], [0], [1], [0, 0, 1, 1], [], []>} : vector<8x32xf32>, vector<32x128xf32>, vector<8x128xf32> -> vector<8x128xf32>
    %83 = arith.addf %81, %82 : vector<8x128xf32>
    %84 = arith.negf %83 : vector<8x128xf32>
    %85 = math.exp %84 : vector<8x128xf32>
    %cst_29 = arith.constant 1.000000e+00 : f32
    %86 = vector.broadcast %cst_29 : f32 to vector<8x128xf32>
    %87 = arith.addf %86, %85 : vector<8x128xf32>
    %88 = arith.divf %86, %87 : vector<8x128xf32>
    %cst_30 = arith.constant 2.000000e+00 : f32
    %89 = vector.broadcast %cst_30 : f32 to vector<8x128xf32>
    %90 = arith.mulf %89, %88 : vector<8x128xf32>
    %cst_31 = arith.constant 1.000000e+00 : f32
    %91 = vector.broadcast %cst_31 : f32 to vector<8x128xf32>
    %92 = arith.subf %90, %91 : vector<8x128xf32>
    %93 = arith.select %12, %92, %88 : vector<8x128xi1>, vector<8x128xf32>
    %94 = vector.extract_strided_slice %93 {offsets = [0, 0], sizes = [8, 32], strides = [1, 1]} : vector<8x128xf32> to vector<8x32xf32>
    %95 = vector.extract_strided_slice %93 {offsets = [0, 32], sizes = [8, 32], strides = [1, 1]} : vector<8x128xf32> to vector<8x32xf32>
    %96 = vector.extract_strided_slice %93 {offsets = [0, 64], sizes = [8, 32], strides = [1, 1]} : vector<8x128xf32> to vector<8x32xf32>
    %97 = vector.extract_strided_slice %93 {offsets = [0, 96], sizes = [8, 32], strides = [1, 1]} : vector<8x128xf32> to vector<8x32xf32>
    %98 = arith.mulf %95, %69 : vector<8x32xf32>
    %99 = arith.mulf %94, %96 : vector<8x32xf32>
    %100 = arith.addf %98, %99 : vector<8x32xf32>
    %101 = math.tanh %100 : vector<8x32xf32>
    %102 = arith.mulf %97, %101 : vector<8x32xf32>
    %103 = vector.broadcast %15 : vector<1x32xf32> to vector<8x32xf32>
    %104 = arith.mulf %102, %103 : vector<8x32xf32>
    %cst_32 = arith.constant dense<0.000000e+00> : vector<8xf32>
    %105 = vector.multi_reduction <add>, %104, %cst_32 [1] : vector<8x32xf32> to vector<8xf32>
    %106 = vector.shape_cast %105 : vector<8xf32> to vector<8x1xf32>
    %c2_i32 = arith.constant 2 : i32
    %107 = vector.broadcast %c2_i32 : i32 to vector<8x8xi32>
    %108 = arith.cmpi eq, %13, %107 : vector<8x8xi32>
    %109 = vector.shape_cast %106 : vector<8x1xf32> to vector<8x1xf32>
    %110 = vector.broadcast %109 : vector<8x1xf32> to vector<8x8xf32>
    %111 = arith.select %108, %110, %80 : vector<8x8xi1>, vector<8x8xf32>
    %c24 = arith.constant 24 : index
    %c0_33 = arith.constant 0 : index
    %112 = vector.load %arg7[%c24, %c0_33] : memref<64x128xf32, #tpu.memory_space<vmem>>, vector<8x128xf32>
    %cst_34 = arith.constant dense<0.000000e+00> : vector<8x128xf32>
    %113 = tpu.matmul %102, %14, %cst_34 {dimension_numbers = #tpu.dot_dimension_numbers<[1], [0], [0], [1], [0, 0, 1, 1], [], []>} : vector<8x32xf32>, vector<32x128xf32>, vector<8x128xf32> -> vector<8x128xf32>
    %114 = arith.addf %112, %113 : vector<8x128xf32>
    %115 = arith.negf %114 : vector<8x128xf32>
    %116 = math.exp %115 : vector<8x128xf32>
    %cst_35 = arith.constant 1.000000e+00 : f32
    %117 = vector.broadcast %cst_35 : f32 to vector<8x128xf32>
    %118 = arith.addf %117, %116 : vector<8x128xf32>
    %119 = arith.divf %117, %118 : vector<8x128xf32>
    %cst_36 = arith.constant 2.000000e+00 : f32
    %120 = vector.broadcast %cst_36 : f32 to vector<8x128xf32>
    %121 = arith.mulf %120, %119 : vector<8x128xf32>
    %cst_37 = arith.constant 1.000000e+00 : f32
    %122 = vector.broadcast %cst_37 : f32 to vector<8x128xf32>
    %123 = arith.subf %121, %122 : vector<8x128xf32>
    %124 = arith.select %12, %123, %119 : vector<8x128xi1>, vector<8x128xf32>
    %125 = vector.extract_strided_slice %124 {offsets = [0, 0], sizes = [8, 32], strides = [1, 1]} : vector<8x128xf32> to vector<8x32xf32>
    %126 = vector.extract_strided_slice %124 {offsets = [0, 32], sizes = [8, 32], strides = [1, 1]} : vector<8x128xf32> to vector<8x32xf32>
    %127 = vector.extract_strided_slice %124 {offsets = [0, 64], sizes = [8, 32], strides = [1, 1]} : vector<8x128xf32> to vector<8x32xf32>
    %128 = vector.extract_strided_slice %124 {offsets = [0, 96], sizes = [8, 32], strides = [1, 1]} : vector<8x128xf32> to vector<8x32xf32>
    %129 = arith.mulf %126, %100 : vector<8x32xf32>
    %130 = arith.mulf %125, %127 : vector<8x32xf32>
    %131 = arith.addf %129, %130 : vector<8x32xf32>
    %132 = math.tanh %131 : vector<8x32xf32>
    %133 = arith.mulf %128, %132 : vector<8x32xf32>
    %134 = vector.broadcast %15 : vector<1x32xf32> to vector<8x32xf32>
    %135 = arith.mulf %133, %134 : vector<8x32xf32>
    %cst_38 = arith.constant dense<0.000000e+00> : vector<8xf32>
    %136 = vector.multi_reduction <add>, %135, %cst_38 [1] : vector<8x32xf32> to vector<8xf32>
    %137 = vector.shape_cast %136 : vector<8xf32> to vector<8x1xf32>
    %c3_i32 = arith.constant 3 : i32
    %138 = vector.broadcast %c3_i32 : i32 to vector<8x8xi32>
    %139 = arith.cmpi eq, %13, %138 : vector<8x8xi32>
    %140 = vector.shape_cast %137 : vector<8x1xf32> to vector<8x1xf32>
    %141 = vector.broadcast %140 : vector<8x1xf32> to vector<8x8xf32>
    %142 = arith.select %139, %141, %111 : vector<8x8xi1>, vector<8x8xf32>
    %c32 = arith.constant 32 : index
    %c0_39 = arith.constant 0 : index
    %143 = vector.load %arg7[%c32, %c0_39] : memref<64x128xf32, #tpu.memory_space<vmem>>, vector<8x128xf32>
    %cst_40 = arith.constant dense<0.000000e+00> : vector<8x128xf32>
    %144 = tpu.matmul %133, %14, %cst_40 {dimension_numbers = #tpu.dot_dimension_numbers<[1], [0], [0], [1], [0, 0, 1, 1], [], []>} : vector<8x32xf32>, vector<32x128xf32>, vector<8x128xf32> -> vector<8x128xf32>
    %145 = arith.addf %143, %144 : vector<8x128xf32>
    %146 = arith.negf %145 : vector<8x128xf32>
    %147 = math.exp %146 : vector<8x128xf32>
    %cst_41 = arith.constant 1.000000e+00 : f32
    %148 = vector.broadcast %cst_41 : f32 to vector<8x128xf32>
    %149 = arith.addf %148, %147 : vector<8x128xf32>
    %150 = arith.divf %148, %149 : vector<8x128xf32>
    %cst_42 = arith.constant 2.000000e+00 : f32
    %151 = vector.broadcast %cst_42 : f32 to vector<8x128xf32>
    %152 = arith.mulf %151, %150 : vector<8x128xf32>
    %cst_43 = arith.constant 1.000000e+00 : f32
    %153 = vector.broadcast %cst_43 : f32 to vector<8x128xf32>
    %154 = arith.subf %152, %153 : vector<8x128xf32>
    %155 = arith.select %12, %154, %150 : vector<8x128xi1>, vector<8x128xf32>
    %156 = vector.extract_strided_slice %155 {offsets = [0, 0], sizes = [8, 32], strides = [1, 1]} : vector<8x128xf32> to vector<8x32xf32>
    %157 = vector.extract_strided_slice %155 {offsets = [0, 32], sizes = [8, 32], strides = [1, 1]} : vector<8x128xf32> to vector<8x32xf32>
    %158 = vector.extract_strided_slice %155 {offsets = [0, 64], sizes = [8, 32], strides = [1, 1]} : vector<8x128xf32> to vector<8x32xf32>
    %159 = vector.extract_strided_slice %155 {offsets = [0, 96], sizes = [8, 32], strides = [1, 1]} : vector<8x128xf32> to vector<8x32xf32>
    %160 = arith.mulf %157, %131 : vector<8x32xf32>
    %161 = arith.mulf %156, %158 : vector<8x32xf32>
    %162 = arith.addf %160, %161 : vector<8x32xf32>
    %163 = math.tanh %162 : vector<8x32xf32>
    %164 = arith.mulf %159, %163 : vector<8x32xf32>
    %165 = vector.broadcast %15 : vector<1x32xf32> to vector<8x32xf32>
    %166 = arith.mulf %164, %165 : vector<8x32xf32>
    %cst_44 = arith.constant dense<0.000000e+00> : vector<8xf32>
    %167 = vector.multi_reduction <add>, %166, %cst_44 [1] : vector<8x32xf32> to vector<8xf32>
    %168 = vector.shape_cast %167 : vector<8xf32> to vector<8x1xf32>
    %c4_i32 = arith.constant 4 : i32
    %169 = vector.broadcast %c4_i32 : i32 to vector<8x8xi32>
    %170 = arith.cmpi eq, %13, %169 : vector<8x8xi32>
    %171 = vector.shape_cast %168 : vector<8x1xf32> to vector<8x1xf32>
    %172 = vector.broadcast %171 : vector<8x1xf32> to vector<8x8xf32>
    %173 = arith.select %170, %172, %142 : vector<8x8xi1>, vector<8x8xf32>
    %c40 = arith.constant 40 : index
    %c0_45 = arith.constant 0 : index
    %174 = vector.load %arg7[%c40, %c0_45] : memref<64x128xf32, #tpu.memory_space<vmem>>, vector<8x128xf32>
    %cst_46 = arith.constant dense<0.000000e+00> : vector<8x128xf32>
    %175 = tpu.matmul %164, %14, %cst_46 {dimension_numbers = #tpu.dot_dimension_numbers<[1], [0], [0], [1], [0, 0, 1, 1], [], []>} : vector<8x32xf32>, vector<32x128xf32>, vector<8x128xf32> -> vector<8x128xf32>
    %176 = arith.addf %174, %175 : vector<8x128xf32>
    %177 = arith.negf %176 : vector<8x128xf32>
    %178 = math.exp %177 : vector<8x128xf32>
    %cst_47 = arith.constant 1.000000e+00 : f32
    %179 = vector.broadcast %cst_47 : f32 to vector<8x128xf32>
    %180 = arith.addf %179, %178 : vector<8x128xf32>
    %181 = arith.divf %179, %180 : vector<8x128xf32>
    %cst_48 = arith.constant 2.000000e+00 : f32
    %182 = vector.broadcast %cst_48 : f32 to vector<8x128xf32>
    %183 = arith.mulf %182, %181 : vector<8x128xf32>
    %cst_49 = arith.constant 1.000000e+00 : f32
    %184 = vector.broadcast %cst_49 : f32 to vector<8x128xf32>
    %185 = arith.subf %183, %184 : vector<8x128xf32>
    %186 = arith.select %12, %185, %181 : vector<8x128xi1>, vector<8x128xf32>
    %187 = vector.extract_strided_slice %186 {offsets = [0, 0], sizes = [8, 32], strides = [1, 1]} : vector<8x128xf32> to vector<8x32xf32>
    %188 = vector.extract_strided_slice %186 {offsets = [0, 32], sizes = [8, 32], strides = [1, 1]} : vector<8x128xf32> to vector<8x32xf32>
    %189 = vector.extract_strided_slice %186 {offsets = [0, 64], sizes = [8, 32], strides = [1, 1]} : vector<8x128xf32> to vector<8x32xf32>
    %190 = vector.extract_strided_slice %186 {offsets = [0, 96], sizes = [8, 32], strides = [1, 1]} : vector<8x128xf32> to vector<8x32xf32>
    %191 = arith.mulf %188, %162 : vector<8x32xf32>
    %192 = arith.mulf %187, %189 : vector<8x32xf32>
    %193 = arith.addf %191, %192 : vector<8x32xf32>
    %194 = math.tanh %193 : vector<8x32xf32>
    %195 = arith.mulf %190, %194 : vector<8x32xf32>
    %196 = vector.broadcast %15 : vector<1x32xf32> to vector<8x32xf32>
    %197 = arith.mulf %195, %196 : vector<8x32xf32>
    %cst_50 = arith.constant dense<0.000000e+00> : vector<8xf32>
    %198 = vector.multi_reduction <add>, %197, %cst_50 [1] : vector<8x32xf32> to vector<8xf32>
    %199 = vector.shape_cast %198 : vector<8xf32> to vector<8x1xf32>
    %c5_i32 = arith.constant 5 : i32
    %200 = vector.broadcast %c5_i32 : i32 to vector<8x8xi32>
    %201 = arith.cmpi eq, %13, %200 : vector<8x8xi32>
    %202 = vector.shape_cast %199 : vector<8x1xf32> to vector<8x1xf32>
    %203 = vector.broadcast %202 : vector<8x1xf32> to vector<8x8xf32>
    %204 = arith.select %201, %203, %173 : vector<8x8xi1>, vector<8x8xf32>
    %c48 = arith.constant 48 : index
    %c0_51 = arith.constant 0 : index
    %205 = vector.load %arg7[%c48, %c0_51] : memref<64x128xf32, #tpu.memory_space<vmem>>, vector<8x128xf32>
    %cst_52 = arith.constant dense<0.000000e+00> : vector<8x128xf32>
    %206 = tpu.matmul %195, %14, %cst_52 {dimension_numbers = #tpu.dot_dimension_numbers<[1], [0], [0], [1], [0, 0, 1, 1], [], []>} : vector<8x32xf32>, vector<32x128xf32>, vector<8x128xf32> -> vector<8x128xf32>
    %207 = arith.addf %205, %206 : vector<8x128xf32>
    %208 = arith.negf %207 : vector<8x128xf32>
    %209 = math.exp %208 : vector<8x128xf32>
    %cst_53 = arith.constant 1.000000e+00 : f32
    %210 = vector.broadcast %cst_53 : f32 to vector<8x128xf32>
    %211 = arith.addf %210, %209 : vector<8x128xf32>
    %212 = arith.divf %210, %211 : vector<8x128xf32>
    %cst_54 = arith.constant 2.000000e+00 : f32
    %213 = vector.broadcast %cst_54 : f32 to vector<8x128xf32>
    %214 = arith.mulf %213, %212 : vector<8x128xf32>
    %cst_55 = arith.constant 1.000000e+00 : f32
    %215 = vector.broadcast %cst_55 : f32 to vector<8x128xf32>
    %216 = arith.subf %214, %215 : vector<8x128xf32>
    %217 = arith.select %12, %216, %212 : vector<8x128xi1>, vector<8x128xf32>
    %218 = vector.extract_strided_slice %217 {offsets = [0, 0], sizes = [8, 32], strides = [1, 1]} : vector<8x128xf32> to vector<8x32xf32>
    %219 = vector.extract_strided_slice %217 {offsets = [0, 32], sizes = [8, 32], strides = [1, 1]} : vector<8x128xf32> to vector<8x32xf32>
    %220 = vector.extract_strided_slice %217 {offsets = [0, 64], sizes = [8, 32], strides = [1, 1]} : vector<8x128xf32> to vector<8x32xf32>
    %221 = vector.extract_strided_slice %217 {offsets = [0, 96], sizes = [8, 32], strides = [1, 1]} : vector<8x128xf32> to vector<8x32xf32>
    %222 = arith.mulf %219, %193 : vector<8x32xf32>
    %223 = arith.mulf %218, %220 : vector<8x32xf32>
    %224 = arith.addf %222, %223 : vector<8x32xf32>
    %225 = math.tanh %224 : vector<8x32xf32>
    %226 = arith.mulf %221, %225 : vector<8x32xf32>
    %227 = vector.broadcast %15 : vector<1x32xf32> to vector<8x32xf32>
    %228 = arith.mulf %226, %227 : vector<8x32xf32>
    %cst_56 = arith.constant dense<0.000000e+00> : vector<8xf32>
    %229 = vector.multi_reduction <add>, %228, %cst_56 [1] : vector<8x32xf32> to vector<8xf32>
    %230 = vector.shape_cast %229 : vector<8xf32> to vector<8x1xf32>
    %c6_i32 = arith.constant 6 : i32
    %231 = vector.broadcast %c6_i32 : i32 to vector<8x8xi32>
    %232 = arith.cmpi eq, %13, %231 : vector<8x8xi32>
    %233 = vector.shape_cast %230 : vector<8x1xf32> to vector<8x1xf32>
    %234 = vector.broadcast %233 : vector<8x1xf32> to vector<8x8xf32>
    %235 = arith.select %232, %234, %204 : vector<8x8xi1>, vector<8x8xf32>
    %c56 = arith.constant 56 : index
    %c0_57 = arith.constant 0 : index
    %236 = vector.load %arg7[%c56, %c0_57] : memref<64x128xf32, #tpu.memory_space<vmem>>, vector<8x128xf32>
    %cst_58 = arith.constant dense<0.000000e+00> : vector<8x128xf32>
    %237 = tpu.matmul %226, %14, %cst_58 {dimension_numbers = #tpu.dot_dimension_numbers<[1], [0], [0], [1], [0, 0, 1, 1], [], []>} : vector<8x32xf32>, vector<32x128xf32>, vector<8x128xf32> -> vector<8x128xf32>
    %238 = arith.addf %236, %237 : vector<8x128xf32>
    %239 = arith.negf %238 : vector<8x128xf32>
    %240 = math.exp %239 : vector<8x128xf32>
    %cst_59 = arith.constant 1.000000e+00 : f32
    %241 = vector.broadcast %cst_59 : f32 to vector<8x128xf32>
    %242 = arith.addf %241, %240 : vector<8x128xf32>
    %243 = arith.divf %241, %242 : vector<8x128xf32>
    %cst_60 = arith.constant 2.000000e+00 : f32
    %244 = vector.broadcast %cst_60 : f32 to vector<8x128xf32>
    %245 = arith.mulf %244, %243 : vector<8x128xf32>
    %cst_61 = arith.constant 1.000000e+00 : f32
    %246 = vector.broadcast %cst_61 : f32 to vector<8x128xf32>
    %247 = arith.subf %245, %246 : vector<8x128xf32>
    %248 = arith.select %12, %247, %243 : vector<8x128xi1>, vector<8x128xf32>
    %249 = vector.extract_strided_slice %248 {offsets = [0, 0], sizes = [8, 32], strides = [1, 1]} : vector<8x128xf32> to vector<8x32xf32>
    %250 = vector.extract_strided_slice %248 {offsets = [0, 32], sizes = [8, 32], strides = [1, 1]} : vector<8x128xf32> to vector<8x32xf32>
    %251 = vector.extract_strided_slice %248 {offsets = [0, 64], sizes = [8, 32], strides = [1, 1]} : vector<8x128xf32> to vector<8x32xf32>
    %252 = vector.extract_strided_slice %248 {offsets = [0, 96], sizes = [8, 32], strides = [1, 1]} : vector<8x128xf32> to vector<8x32xf32>
    %253 = arith.mulf %250, %224 : vector<8x32xf32>
    %254 = arith.mulf %249, %251 : vector<8x32xf32>
    %255 = arith.addf %253, %254 : vector<8x32xf32>
    %256 = math.tanh %255 : vector<8x32xf32>
    %257 = arith.mulf %252, %256 : vector<8x32xf32>
    %258 = vector.broadcast %15 : vector<1x32xf32> to vector<8x32xf32>
    %259 = arith.mulf %257, %258 : vector<8x32xf32>
    %cst_62 = arith.constant dense<0.000000e+00> : vector<8xf32>
    %260 = vector.multi_reduction <add>, %259, %cst_62 [1] : vector<8x32xf32> to vector<8xf32>
    %261 = vector.shape_cast %260 : vector<8xf32> to vector<8x1xf32>
    %c7_i32 = arith.constant 7 : i32
    %262 = vector.broadcast %c7_i32 : i32 to vector<8x8xi32>
    %263 = arith.cmpi eq, %13, %262 : vector<8x8xi32>
    %264 = vector.shape_cast %261 : vector<8x1xf32> to vector<8x1xf32>
    %265 = vector.broadcast %264 : vector<8x1xf32> to vector<8x8xf32>
    %266 = arith.select %263, %265, %235 : vector<8x8xi1>, vector<8x8xf32>
    %c0_63 = arith.constant 0 : index
    %c0_64 = arith.constant 0 : index
    %267 = vector.load %arg5[%c0_63, %c0_64] : memref<1x1xf32, #tpu.memory_space<vmem>>, vector<1x1xf32>
    %268 = vector.broadcast %267 : vector<1x1xf32> to vector<8x8xf32>
    %269 = arith.addf %266, %268 : vector<8x8xf32>
    %c0_65 = arith.constant 0 : index
    %c0_66 = arith.constant 0 : index
    %270 = vector.load %arg6[%c0_65, %c0_66] : memref<8x8xf32, #tpu.memory_space<vmem>>, vector<8x8xf32>
    tpu.vector_store %arg6[%c0_65, %c0_66], %269 {strides = array<i32>} : memref<8x8xf32, #tpu.memory_space<vmem>>, vector<8x8xf32>,
    return
  }
}

</mosaic_0001>

<llo_original>
// kernel: tpu_custom_call.1
$region0: #{tpu_custom_call.1}
  #allocation0 [shape = 'u32[]', space=smem, size = 0x4, offset = 0x4, fixed_abs, tag = 'smem constant byte address 0x4 - core index']
  #allocation1 [shape = 'u32[144,128]{1,0:T(1,128)}', space=vmem, size = 0x12000, scoped, tag = 'internal scratch']
  #allocation2 [shape = 'f32[64,128]{1,0:T(8,128)}', space=vmem, size = 0x8000, scoped, tag = 'scratch operand']
  #allocation3 [shape = 'f32[1,1]{1,0:T(1,128)S(1)}', space=vmem, size = 0x200, scoped, tag = 'scoped memory for tpu_custom_call.1']
  %s0 = inlined_call_operand.vmem [shape: f32[64,4], index: 0, kind: input, shape index: {}]
  %s1 = inlined_call_operand.vmem [shape: f32[4,128], index: 1, kind: input, shape index: {}]
  %s2 = inlined_call_operand.vmem [shape: f32[32,128], index: 2, kind: input, shape index: {}]
  %s3 = inlined_call_operand.vmem [shape: f32[1,128], index: 3, kind: input, shape index: {}]
  %s4 = inlined_call_operand.vmem [shape: f32[1,32], index: 4, kind: input, shape index: {}]
  %s5 = inlined_call_operand.<no memory space> [shape: f32[1,1], index: 5, kind: input, shape index: {}]
  %s6 = inlined_call_operand.hbm [shape: f32[8,8], index: 6, kind: output, shape index: {}]
  %s7 = sld [smem:[#allocation0]]
  $region34: #{tpu_custom_call.1} parent=0
    _
  %s9 = ssub.s32 1, %s7
  %s10 = scalar_select 0, %s9, %s7
  %v11 = vstv %s5
  %12 = vst [vmem:[#allocation3] sm:$0x1] %v11
  $region1: #{tpu_custom_call.1} parent=0
    #allocation4 [shape = 'u8[4096]{0}', space=vmem, size = 0x1000, scoped, tag = 'output window, operand 0, single buffered']
    #allocation5 [shape = 's32[1]{0}', space=sflag, size = 0x4, scoped, tag = 'scoped memory for tpu_custom_call.1']
    %13 = vsyncpa [#allocation5], 0
    // Predicated region
    $region2: #{tpu_custom_call.1} parent=1 // pred_check
      _
    $region3: #{tpu_custom_call.1} parent=1 // pred_check_branch
      %15 = sbr.rel (0) target = $region5
    $region4: #{tpu_custom_call.1} parent=1 // pred_region
      _
    $region5: #{tpu_custom_call.1} parent=1 // pred_fallthru
      _
    // Predicated region
    $region6: #{tpu_custom_call.1} parent=1 // pred_check
      _
    $region7: #{tpu_custom_call.1} parent=1 // pred_check_branch
      %17 = sbr.rel (0) target = $region9
    $region8: #{tpu_custom_call.1} parent=1 // pred_region
      _
    $region9: #{tpu_custom_call.1} parent=1 // pred_fallthru
      _
    // Predicated region
    $region10: #{tpu_custom_call.1} parent=1 // pred_check
      _
    $region11: #{tpu_custom_call.1} parent=1 // pred_check_branch
      %19 = sbr.rel (0) target = $region13
    $region12: #{tpu_custom_call.1} parent=1 // pred_region
      _
    $region13: #{tpu_custom_call.1} parent=1 // pred_fallthru
      _
    // Predicated region
    $region14: #{tpu_custom_call.1} parent=1 // pred_check
      _
    $region15: #{tpu_custom_call.1} parent=1 // pred_check_branch
      %21 = sbr.rel (0) target = $region17
    $region16: #{tpu_custom_call.1} parent=1 // pred_region
      _
    $region17: #{tpu_custom_call.1} parent=1 // pred_fallthru
      _
    // Predicated region
    $region18: #{tpu_custom_call.1} parent=1 // pred_check
      _
    $region19: #{tpu_custom_call.1} parent=1 // pred_check_branch
      %23 = sbr.rel (0) target = $region21
    $region20: #{tpu_custom_call.1} parent=1 // pred_region
      _
    $region21: #{tpu_custom_call.1} parent=1 // pred_fallthru
      _
    // Predicated region
    $region22: #{tpu_custom_call.1} parent=1 // pred_check
      _
    $region23: #{tpu_custom_call.1} parent=1 // pred_check_branch
      %25 = sbr.rel (0) target = $region25
    $region24: #{tpu_custom_call.1} parent=1 // pred_region
      _
    $region25: #{tpu_custom_call.1} parent=1 // pred_fallthru
      _
    %v26 = vld [vmem:[%s0] sm:$0xff]
    %v27 = vld [vmem:[%s0 + $0x8] sm:$0xff]
    %v28 = vld [vmem:[%s0 + $0x10] sm:$0xff]
    %v29 = vld [vmem:[%s0 + $0x18] sm:$0xff]
    %v30 = vld [vmem:[%s0 + $0x20] sm:$0xff]
    %v31 = vld [vmem:[%s0 + $0x28] sm:$0xff]
    %v32 = vld [vmem:[%s0 + $0x30] sm:$0xff]
    %v33 = vld [vmem:[%s0 + $0x38] sm:$0xff]
    %v34 = vld [vmem:[%s1] sm:$0xf]
    %v35 = vld [vmem:[%s3] sm:$0x1]
    %v37 = vlaneseq
    %v38 = vshrl.u32 %v37, 7
    %v39 = vsub.s32 0, %v38
    %v40 = vrot.slane %v35, %v39
    %vm42 = vcmask 31744
    %v44 = vsel %vm42, %v26, 0
    %v47 = vsel %vm42, %v27, 0
    %v50 = vsel %vm42, %v28, 0
    %v53 = vsel %vm42, %v29, 0
    %v56 = vsel %vm42, %v30, 0
    %v59 = vsel %vm42, %v31, 0
    %v62 = vsel %vm42, %v32, 0
    %v65 = vsel %vm42, %v33, 0
    %vm67 = vcmask 1043456
    %v69 = vsel %vm67, %v34, 0
    %71 = vmatprep.subr.mxu0 0.0
    %72 = vmatpush1.msra.mxu0 %v69
    %73 = vmatprep.subr.mxu0 0.0
    %74 = vmatpush1.msra.mxu0 0.0
    %75 = vmatprep.subr.mxu0 0.0
    %76 = vmatpush1.msra.mxu0 0.0
    %77 = vmatprep.subr.mxu0 0.0
    %78 = vmatpush1.msra.mxu0 0.0
    %79 = vmatprep.subr.mxu0 0.0
    %80 = vmatpush1.msra.mxu0 0.0
    %81 = vmatprep.subr.mxu0 0.0
    %82 = vmatpush1.msra.mxu0 0.0
    %83 = vmatprep.subr.mxu0 0.0
    %84 = vmatpush1.msra.mxu0 0.0
    %85 = vmatprep.subr.mxu0 0.0
    %86 = vmatpush1.msra.mxu0 0.0
    %87 = vmatprep.subr.mxu0 0.0
    %88 = vmatpush1.msra.mxu0 0.0
    %89 = vmatprep.subr.mxu0 0.0
    %90 = vmatpush1.msra.mxu0 0.0
    %91 = vmatprep.subr.mxu0 0.0
    %92 = vmatpush1.msra.mxu0 0.0
    %93 = vmatprep.subr.mxu0 0.0
    %94 = vmatpush1.msra.mxu0 0.0
    %95 = vmatprep.subr.mxu0 0.0
    %96 = vmatpush1.msra.mxu0 0.0
    %97 = vmatprep.subr.mxu0 0.0
    %98 = vmatpush1.msra.mxu0 0.0
    %99 = vmatprep.subr.mxu0 0.0
    %100 = vmatpush1.msra.mxu0 0.0
    %101 = vmatprep.subr.mxu0 0.0
    %102 = vmatpush1.msra.mxu0 0.0
    %103 = vmatprep.subr.mxu0 0.0
    %104 = vmatpush1.msra.mxu0 0.0
    %105 = vmatprep.subr.mxu0 0.0
    %106 = vmatpush1.msra.mxu0 0.0
    %107 = vmatprep.subr.mxu0 0.0
    %108 = vmatpush1.msra.mxu0 0.0
    %109 = vmatprep.subr.mxu0 0.0
    %110 = vmatpush1.msra.mxu0 0.0
    %111 = vmatprep.subr.mxu0 0.0
    %112 = vmatpush1.msra.mxu0 0.0
    %113 = vmatprep.subr.mxu0 0.0
    %114 = vmatpush1.msra.mxu0 0.0
    %115 = vmatprep.subr.mxu0 0.0
    %116 = vmatpush1.msra.mxu0 0.0
    %117 = vmatprep.subr.mxu0 0.0
    %118 = vmatpush1.msra.mxu0 0.0
    %119 = vmatprep.subr.mxu0 0.0
    %120 = vmatpush1.msra.mxu0 0.0
    %121 = vmatprep.subr.mxu0 0.0
    %122 = vmatpush1.msra.mxu0 0.0
    %123 = vmatprep.subr.mxu0 0.0
    %124 = vmatpush1.msra.mxu0 0.0
    %125 = vmatprep.subr.mxu0 0.0
    %126 = vmatpush1.msra.mxu0 0.0
    %127 = vmatprep.subr.mxu0 0.0
    %128 = vmatpush1.msra.mxu0 0.0
    %129 = vmatprep.subr.mxu0 0.0
    %130 = vmatpush1.msra.mxu0 0.0
    %131 = vmatprep.subr.mxu0 0.0
    %132 = vmatpush1.msra.mxu0 0.0
    %133 = vmatprep.subr.mxu0 0.0
    %134 = vmatpush1.msra.mxu0 0.0
    %135 = vmatprep.mubr.f32.mxu0 0.0
    %136 = vmatmul.mubr.f32.gmra.mrb[0].mxu0 %v44
    %v137 = vpop.f32.mrb[0].mxu0
    %v138 = vadd.f32 %v40, %v137
    %v139 = vpop.f32.mrb[0].mxu0
    %140 = vmatprep.mubr.f32.mxu0 0.0
    %141 = vmatmul.mubr.f32.gmra.mrb[0].mxu0 %v47
    %v142 = vpop.f32.mrb[0].mxu0
    %v143 = vadd.f32 %v40, %v142
    %v144 = vpop.f32.mrb[0].mxu0
    %145 = vmatprep.mubr.f32.mxu0 0.0
    %146 = vmatmul.mubr.f32.gmra.mrb[0].mxu0 %v50
    %v147 = vpop.f32.mrb[0].mxu0
    %v148 = vadd.f32 %v40, %v147
    %v149 = vpop.f32.mrb[0].mxu0
    %150 = vmatprep.mubr.f32.mxu0 0.0
    %151 = vmatmul.mubr.f32.gmra.mrb[0].mxu0 %v53
    %v152 = vpop.f32.mrb[0].mxu0
    %v153 = vadd.f32 %v40, %v152
    %v154 = vpop.f32.mrb[0].mxu0
    %155 = vmatprep.mubr.f32.mxu0 0.0
    %156 = vmatmul.mubr.f32.gmra.mrb[0].mxu0 %v56
    %v157 = vpop.f32.mrb[0].mxu0
    %v158 = vadd.f32 %v40, %v157
    %v159 = vpop.f32.mrb[0].mxu0
    %160 = vmatprep.mubr.f32.mxu0 0.0
    %161 = vmatmul.mubr.f32.gmra.mrb[0].mxu0 %v59
    %v162 = vpop.f32.mrb[0].mxu0
    %v163 = vadd.f32 %v40, %v162
    %v164 = vpop.f32.mrb[0].mxu0
    %165 = vmatprep.mubr.f32.mxu0 0.0
    %166 = vmatmul.mubr.f32.gmra.mrb[0].mxu0 %v62
    %v167 = vpop.f32.mrb[0].mxu0
    %v168 = vadd.f32 %v40, %v167
    %v169 = vpop.f32.mrb[0].mxu0
    %170 = vmatprep.mubr.f32.mxu0 0.0
    %171 = vmatmul.mubr.f32.gmra.mrb[0].mxu0 %v65
    %v172 = vpop.f32.mrb[0].mxu0
    %v173 = vadd.f32 %v40, %v172
    %v174 = vpop.f32.mrb[0].mxu0
    %175 = vdwg.mxu0
    %176 = vst [vmem:[#allocation2] sm:$0xff] %v138
    %177 = vst [vmem:[#allocation2 + $0x8] sm:$0xff] %v143
    %178 = vst [vmem:[#allocation2 + $0x10] sm:$0xff] %v148
    %179 = vst [vmem:[#allocation2 + $0x18] sm:$0xff] %v153
    %180 = vst [vmem:[#allocation2 + $0x20] sm:$0xff] %v158
    %181 = vst [vmem:[#allocation2 + $0x28] sm:$0xff] %v163
    %182 = vst [vmem:[#allocation2 + $0x30] sm:$0xff] %v168
    %183 = vst [vmem:[#allocation2 + $0x38] sm:$0xff] %v173
    %v184 = vlaneseq
    %v185 = vand.u32 %v184, 127
    %vm186 = vcmp.ge.s32.totalorder %v185, 64
    %vm187 = vcmp.lt.s32.totalorder %v185, 96
    %vm188 = vmand %vm186, %vm187
    %v189 = vld [vmem:[%s2] sm:$0xff]
    %v190 = vld [vmem:[%s2 + $0x8] sm:$0xff]
    %v191 = vld [vmem:[%s2 + $0x10] sm:$0xff]
    %v192 = vld [vmem:[%s2 + $0x18] sm:$0xff]
    %v193 = vld [vmem:[%s4] sm:$0x1]
    %v194 = vld [vmem:[#allocation2] sm:$0xff]
    %vm195 = vcmask 261120
    %v197 = vsel %vm195, 0.0, 0
    %199 = vmatprep.subr.mxu0 0.0
    %200 = vmatpush1.msra.mxu0 %v189
    %201 = vmatprep.subr.mxu0 0.0
    %202 = vmatpush1.msra.mxu0 %v190
    %203 = vmatprep.subr.mxu0 0.0
    %204 = vmatpush1.msra.mxu0 %v191
    %205 = vmatprep.subr.mxu0 0.0
    %206 = vmatpush1.msra.mxu0 %v192
    %207 = vmatprep.subr.mxu0 0.0
    %208 = vmatpush1.msra.mxu0 0.0
    %209 = vmatprep.subr.mxu0 0.0
    %210 = vmatpush1.msra.mxu0 0.0
    %211 = vmatprep.subr.mxu0 0.0
    %212 = vmatpush1.msra.mxu0 0.0
    %213 = vmatprep.subr.mxu0 0.0
    %214 = vmatpush1.msra.mxu0 0.0
    %215 = vmatprep.subr.mxu0 0.0
    %216 = vmatpush1.msra.mxu0 0.0
    %217 = vmatprep.subr.mxu0 0.0
    %218 = vmatpush1.msra.mxu0 0.0
    %219 = vmatprep.subr.mxu0 0.0
    %220 = vmatpush1.msra.mxu0 0.0
    %221 = vmatprep.subr.mxu0 0.0
    %222 = vmatpush1.msra.mxu0 0.0
    %223 = vmatprep.subr.mxu0 0.0
    %224 = vmatpush1.msra.mxu0 0.0
    %225 = vmatprep.subr.mxu0 0.0
    %226 = vmatpush1.msra.mxu0 0.0
    %227 = vmatprep.subr.mxu0 0.0
    %228 = vmatpush1.msra.mxu0 0.0
    %229 = vmatprep.subr.mxu0 0.0
    %230 = vmatpush1.msra.mxu0 0.0
    %231 = vmatprep.subr.mxu0 0.0
    %232 = vmatpush1.msra.mxu0 0.0
    %233 = vmatprep.subr.mxu0 0.0
    %234 = vmatpush1.msra.mxu0 0.0
    %235 = vmatprep.subr.mxu0 0.0
    %236 = vmatpush1.msra.mxu0 0.0
    %237 = vmatprep.subr.mxu0 0.0
    %238 = vmatpush1.msra.mxu0 0.0
    %239 = vmatprep.subr.mxu0 0.0
    %240 = vmatpush1.msra.mxu0 0.0
    %241 = vmatprep.subr.mxu0 0.0
    %242 = vmatpush1.msra.mxu0 0.0
    %243 = vmatprep.subr.mxu0 0.0
    %244 = vmatpush1.msra.mxu0 0.0
    %245 = vmatprep.subr.mxu0 0.0
    %246 = vmatpush1.msra.mxu0 0.0
    %247 = vmatprep.subr.mxu0 0.0
    %248 = vmatpush1.msra.mxu0 0.0
    %249 = vmatprep.subr.mxu0 0.0
    %250 = vmatpush1.msra.mxu0 0.0
    %251 = vmatprep.subr.mxu0 0.0
    %252 = vmatpush1.msra.mxu0 0.0
    %253 = vmatprep.subr.mxu0 0.0
    %254 = vmatpush1.msra.mxu0 0.0
    %255 = vmatprep.subr.mxu0 0.0
    %256 = vmatpush1.msra.mxu0 0.0
    %257 = vmatprep.subr.mxu0 0.0
    %258 = vmatpush1.msra.mxu0 0.0
    %259 = vmatprep.subr.mxu0 0.0
    %260 = vmatpush1.msra.mxu0 0.0
    %261 = vmatprep.subr.mxu0 0.0
    %262 = vmatpush1.msra.mxu0 0.0
    %263 = vmatprep.mubr.f32.mxu0 0.0
    %264 = vmatmul.mubr.f32.gmra.mrb[0].mxu0 %v197
    %v265 = vpop.f32.mrb[0].mxu0
    %v266 = vadd.f32 0.0, %v265
    %v267 = vpop.f32.mrb[0].mxu0
    %268 = vdwg.mxu0
    %v269 = vadd.f32 %v194, %v266
    %v270 = vxor.u32 %v269, 2147483648
    %v271 = vmul.f32 %v270, 1.442695
    %v272 = vpow.pop %v271
    %v273 = vadd.f32 %v272, 1.0
    %v274 = vrcp.pop %v273
    %v275 = vmul.f32 1.0, %v274
    %v276 = vmul.f32 %v275, 2.0
    %v277 = vsub.f32 %v276, 1.0
    %v278 = vsel %vm188, %v277, %v275
    %v279 = vmul.f32 %v278, 0.0
    %281 = vrot.lane.b32.xlu0 %v278, 64
    %v282 = vpop.permute.xlu0 %281
    %v284 = vmul.f32 %v278, %v282
    %286 = vrot.lane.b32.xlu0 %v284, 32
    %v287 = vpop.permute.xlu0 %286
    %v289 = vadd.f32 %v279, %v287
    %v290 = vtanh.pop %v289
    %292 = vrot.lane.b32.xlu0 %v290, 64
    %v293 = vpop.permute.xlu0 %292
    %v295 = vmul.f32 %v278, %v293
    %v297 = vlaneseq
    %v298 = vshrl.u32 %v297, 7
    %v299 = vsub.s32 0, %v298
    %v300 = vrot.slane %v193, %v299
    %301 = vrot.lane.b32.xlu0 %v300, 96
    %v302 = vpop.permute.xlu0 %301
    %v304 = vmul.f32 %v295, %v302
    %306 = vrot.lane.b32.xlu0 %v304, 32
    %v307 = vpop.permute.xlu0 %306
    %v309 = vsel %vm195, %v307, 0.0
    %310 = vadd.xlane.f32.xlu0 %v309
    %v311 = vpop.xlane.xlu0 %310
    %vm312 = vcmp.eq.s32.totalorder %v185, 0
    %v313 = vsel %vm312, %v311, 0.0
    %v314 = vld [vmem:[#allocation2 + $0x8] sm:$0xff]
    %316 = vrot.lane.b32.xlu0 %v295, 32
    %v317 = vpop.permute.xlu0 %316
    %v318 = vsel %vm195, %v317, 0
    %320 = vmatprep.subr.mxu0 0.0
    %321 = vmatpush1.msra.mxu0 %v189
    %322 = vmatprep.subr.mxu0 0.0
    %323 = vmatpush1.msra.mxu0 %v190
    %324 = vmatprep.subr.mxu0 0.0
    %325 = vmatpush1.msra.mxu0 %v191
    %326 = vmatprep.subr.mxu0 0.0
    %327 = vmatpush1.msra.mxu0 %v192
    %328 = vmatprep.subr.mxu0 0.0
    %329 = vmatpush1.msra.mxu0 0.0
    %330 = vmatprep.subr.mxu0 0.0
    %331 = vmatpush1.msra.mxu0 0.0
    %332 = vmatprep.subr.mxu0 0.0
    %333 = vmatpush1.msra.mxu0 0.0
    %334 = vmatprep.subr.mxu0 0.0
    %335 = vmatpush1.msra.mxu0 0.0
    %336 = vmatprep.subr.mxu0 0.0
    %337 = vmatpush1.msra.mxu0 0.0
    %338 = vmatprep.subr.mxu0 0.0
    %339 = vmatpush1.msra.mxu0 0.0
    %340 = vmatprep.subr.mxu0 0.0
    %341 = vmatpush1.msra.mxu0 0.0
    %342 = vmatprep.subr.mxu0 0.0
    %343 = vmatpush1.msra.mxu0 0.0
    %344 = vmatprep.subr.mxu0 0.0
    %345 = vmatpush1.msra.mxu0 0.0
    %346 = vmatprep.subr.mxu0 0.0
    %347 = vmatpush1.msra.mxu0 0.0
    %348 = vmatprep.subr.mxu0 0.0
    %349 = vmatpush1.msra.mxu0 0.0
    %350 = vmatprep.subr.mxu0 0.0
    %351 = vmatpush1.msra.mxu0 0.0
    %352 = vmatprep.subr.mxu0 0.0
    %353 = vmatpush1.msra.mxu0 0.0
    %354 = vmatprep.subr.mxu0 0.0
    %355 = vmatpush1.msra.mxu0 0.0
    %356 = vmatprep.subr.mxu0 0.0
    %357 = vmatpush1.msra.mxu0 0.0
    %358 = vmatprep.subr.mxu0 0.0
    %359 = vmatpush1.msra.mxu0 0.0
    %360 = vmatprep.subr.mxu0 0.0
    %361 = vmatpush1.msra.mxu0 0.0
    %362 = vmatprep.subr.mxu0 0.0
    %363 = vmatpush1.msra.mxu0 0.0
    %364 = vmatprep.subr.mxu0 0.0
    %365 = vmatpush1.msra.mxu0 0.0
    %366 = vmatprep.subr.mxu0 0.0
    %367 = vmatpush1.msra.mxu0 0.0
    %368 = vmatprep.subr.mxu0 0.0
    %369 = vmatpush1.msra.mxu0 0.0
    %370 = vmatprep.subr.mxu0 0.0
    %371 = vmatpush1.msra.mxu0 0.0
    %372 = vmatprep.subr.mxu0 0.0
    %373 = vmatpush1.msra.mxu0 0.0
    %374 = vmatprep.subr.mxu0 0.0
    %375 = vmatpush1.msra.mxu0 0.0
    %376 = vmatprep.subr.mxu0 0.0
    %377 = vmatpush1.msra.mxu0 0.0
    %378 = vmatprep.subr.mxu0 0.0
    %379 = vmatpush1.msra.mxu0 0.0
    %380 = vmatprep.subr.mxu0 0.0
    %381 = vmatpush1.msra.mxu0 0.0
    %382 = vmatprep.subr.mxu0 0.0
    %383 = vmatpush1.msra.mxu0 0.0
    %384 = vmatprep.mubr.f32.mxu0 0.0
    %385 = vmatmul.mubr.f32.gmra.mrb[0].mxu0 %v318
    %v386 = vpop.f32.mrb[0].mxu0
    %v387 = vadd.f32 0.0, %v386
    %v388 = vpop.f32.mrb[0].mxu0
    %389 = vdwg.mxu0
    %v390 = vadd.f32 %v314, %v387
    %v391 = vxor.u32 %v390, 2147483648
    %v392 = vmul.f32 %v391, 1.442695
    %v393 = vpow.pop %v392
    %v394 = vadd.f32 %v393, 1.0
    %v395 = vrcp.pop %v394
    %v396 = vmul.f32 1.0, %v395
    %v397 = vmul.f32 %v396, 2.0
    %v398 = vsub.f32 %v397, 1.0
    %v399 = vsel %vm188, %v398, %v396
    %v400 = vmul.f32 %v399, %v289
    %402 = vrot.lane.b32.xlu0 %v399, 64
    %v403 = vpop.permute.xlu0 %402
    %v405 = vmul.f32 %v399, %v403
    %407 = vrot.lane.b32.xlu0 %v405, 32
    %v408 = vpop.permute.xlu0 %407
    %v410 = vadd.f32 %v400, %v408
    %v411 = vtanh.pop %v410
    %413 = vrot.lane.b32.xlu0 %v411, 64
    %v414 = vpop.permute.xlu0 %413
    %v416 = vmul.f32 %v399, %v414
    %v417 = vmul.f32 %v416, %v302
    %419 = vrot.lane.b32.xlu0 %v417, 32
    %v420 = vpop.permute.xlu0 %419
    %v422 = vsel %vm195, %v420, 0.0
    %423 = vadd.xlane.f32.xlu0 %v422
    %v424 = vpop.xlane.xlu0 %423
    %vm425 = vcmp.eq.s32.totalorder %v185, 1
    %v426 = vsel %vm425, %v424, %v313
    %v427 = vld [vmem:[#allocation2 + $0x10] sm:$0xff]
    %429 = vrot.lane.b32.xlu0 %v416, 32
    %v430 = vpop.permute.xlu0 %429
    %v431 = vsel %vm195, %v430, 0
    %433 = vmatprep.subr.mxu0 0.0
    %434 = vmatpush1.msra.mxu0 %v189
    %435 = vmatprep.subr.mxu0 0.0
    %436 = vmatpush1.msra.mxu0 %v190
    %437 = vmatprep.subr.mxu0 0.0
    %438 = vmatpush1.msra.mxu0 %v191
    %439 = vmatprep.subr.mxu0 0.0
    %440 = vmatpush1.msra.mxu0 %v192
    %441 = vmatprep.subr.mxu0 0.0
    %442 = vmatpush1.msra.mxu0 0.0
    %443 = vmatprep.subr.mxu0 0.0
    %444 = vmatpush1.msra.mxu0 0.0
    %445 = vmatprep.subr.mxu0 0.0
    %446 = vmatpush1.msra.mxu0 0.0
    %447 = vmatprep.subr.mxu0 0.0
    %448 = vmatpush1.msra.mxu0 0.0
    %449 = vmatprep.subr.mxu0 0.0
    %450 = vmatpush1.msra.mxu0 0.0
    %451 = vmatprep.subr.mxu0 0.0
    %452 = vmatpush1.msra.mxu0 0.0
    %453 = vmatprep.subr.mxu0 0.0
    %454 = vmatpush1.msra.mxu0 0.0
    %455 = vmatprep.subr.mxu0 0.0
    %456 = vmatpush1.msra.mxu0 0.0
    %457 = vmatprep.subr.mxu0 0.0
    %458 = vmatpush1.msra.mxu0 0.0
    %459 = vmatprep.subr.mxu0 0.0
    %460 = vmatpush1.msra.mxu0 0.0
    %461 = vmatprep.subr.mxu0 0.0
    %462 = vmatpush1.msra.mxu0 0.0
    %463 = vmatprep.subr.mxu0 0.0
    %464 = vmatpush1.msra.mxu0 0.0
    %465 = vmatprep.subr.mxu0 0.0
    %466 = vmatpush1.msra.mxu0 0.0
    %467 = vmatprep.subr.mxu0 0.0
    %468 = vmatpush1.msra.mxu0 0.0
    %469 = vmatprep.subr.mxu0 0.0
    %470 = vmatpush1.msra.mxu0 0.0
    %471 = vmatprep.subr.mxu0 0.0
    %472 = vmatpush1.msra.mxu0 0.0
    %473 = vmatprep.subr.mxu0 0.0
    %474 = vmatpush1.msra.mxu0 0.0
    %475 = vmatprep.subr.mxu0 0.0
    %476 = vmatpush1.msra.mxu0 0.0
    %477 = vmatprep.subr.mxu0 0.0
    %478 = vmatpush1.msra.mxu0 0.0
    %479 = vmatprep.subr.mxu0 0.0
    %480 = vmatpush1.msra.mxu0 0.0
    %481 = vmatprep.subr.mxu0 0.0
    %482 = vmatpush1.msra.mxu0 0.0
    %483 = vmatprep.subr.mxu0 0.0
    %484 = vmatpush1.msra.mxu0 0.0
    %485 = vmatprep.subr.mxu0 0.0
    %486 = vmatpush1.msra.mxu0 0.0
    %487 = vmatprep.subr.mxu0 0.0
    %488 = vmatpush1.msra.mxu0 0.0
    %489 = vmatprep.subr.mxu0 0.0
    %490 = vmatpush1.msra.mxu0 0.0
    %491 = vmatprep.subr.mxu0 0.0
    %492 = vmatpush1.msra.mxu0 0.0
    %493 = vmatprep.subr.mxu0 0.0
    %494 = vmatpush1.msra.mxu0 0.0
    %495 = vmatprep.subr.mxu0 0.0
    %496 = vmatpush1.msra.mxu0 0.0
    %497 = vmatprep.mubr.f32.mxu0 0.0
    %498 = vmatmul.mubr.f32.gmra.mrb[0].mxu0 %v431
    %v499 = vpop.f32.mrb[0].mxu0
    %v500 = vadd.f32 0.0, %v499
    %v501 = vpop.f32.mrb[0].mxu0
    %502 = vdwg.mxu0
    %v503 = vadd.f32 %v427, %v500
    %v504 = vxor.u32 %v503, 2147483648
    %v505 = vmul.f32 %v504, 1.442695
    %v506 = vpow.pop %v505
    %v507 = vadd.f32 %v506, 1.0
    %v508 = vrcp.pop %v507
    %v509 = vmul.f32 1.0, %v508
    %v510 = vmul.f32 %v509, 2.0
    %v511 = vsub.f32 %v510, 1.0
    %v512 = vsel %vm188, %v511, %v509
    %v513 = vmul.f32 %v512, %v410
    %515 = vrot.lane.b32.xlu0 %v512, 64
    %v516 = vpop.permute.xlu0 %515
    %v518 = vmul.f32 %v512, %v516
    %520 = vrot.lane.b32.xlu0 %v518, 32
    %v521 = vpop.permute.xlu0 %520
    %v523 = vadd.f32 %v513, %v521
    %v524 = vtanh.pop %v523
    %526 = vrot.lane.b32.xlu0 %v524, 64
    %v527 = vpop.permute.xlu0 %526
    %v529 = vmul.f32 %v512, %v527
    %v530 = vmul.f32 %v529, %v302
    %532 = vrot.lane.b32.xlu0 %v530, 32
    %v533 = vpop.permute.xlu0 %532
    %v535 = vsel %vm195, %v533, 0.0
    %536 = vadd.xlane.f32.xlu0 %v535
    %v537 = vpop.xlane.xlu0 %536
    %vm538 = vcmp.eq.s32.totalorder %v185, 2
    %v539 = vsel %vm538, %v537, %v426
    %v540 = vld [vmem:[#allocation2 + $0x18] sm:$0xff]
    %542 = vrot.lane.b32.xlu0 %v529, 32
    %v543 = vpop.permute.xlu0 %542
    %v544 = vsel %vm195, %v543, 0
    %546 = vmatprep.subr.mxu0 0.0
    %547 = vmatpush1.msra.mxu0 %v189
    %548 = vmatprep.subr.mxu0 0.0
    %549 = vmatpush1.msra.mxu0 %v190
    %550 = vmatprep.subr.mxu0 0.0
    %551 = vmatpush1.msra.mxu0 %v191
    %552 = vmatprep.subr.mxu0 0.0
    %553 = vmatpush1.msra.mxu0 %v192
    %554 = vmatprep.subr.mxu0 0.0
    %555 = vmatpush1.msra.mxu0 0.0
    %556 = vmatprep.subr.mxu0 0.0
    %557 = vmatpush1.msra.mxu0 0.0
    %558 = vmatprep.subr.mxu0 0.0
    %559 = vmatpush1.msra.mxu0 0.0
    %560 = vmatprep.subr.mxu0 0.0
    %561 = vmatpush1.msra.mxu0 0.0
    %562 = vmatprep.subr.mxu0 0.0
    %563 = vmatpush1.msra.mxu0 0.0
    %564 = vmatprep.subr.mxu0 0.0
    %565 = vmatpush1.msra.mxu0 0.0
    %566 = vmatprep.subr.mxu0 0.0
    %567 = vmatpush1.msra.mxu0 0.0
    %568 = vmatprep.subr.mxu0 0.0
    %569 = vmatpush1.msra.mxu0 0.0
    %570 = vmatprep.subr.mxu0 0.0
    %571 = vmatpush1.msra.mxu0 0.0
    %572 = vmatprep.subr.mxu0 0.0
    %573 = vmatpush1.msra.mxu0 0.0
    %574 = vmatprep.subr.mxu0 0.0
    %575 = vmatpush1.msra.mxu0 0.0
    %576 = vmatprep.subr.mxu0 0.0
    %577 = vmatpush1.msra.mxu0 0.0
    %578 = vmatprep.subr.mxu0 0.0
    %579 = vmatpush1.msra.mxu0 0.0
    %580 = vmatprep.subr.mxu0 0.0
    %581 = vmatpush1.msra.mxu0 0.0
    %582 = vmatprep.subr.mxu0 0.0
    %583 = vmatpush1.msra.mxu0 0.0
    %584 = vmatprep.subr.mxu0 0.0
    %585 = vmatpush1.msra.mxu0 0.0
    %586 = vmatprep.subr.mxu0 0.0
    %587 = vmatpush1.msra.mxu0 0.0
    %588 = vmatprep.subr.mxu0 0.0
    %589 = vmatpush1.msra.mxu0 0.0
    %590 = vmatprep.subr.mxu0 0.0
    %591 = vmatpush1.msra.mxu0 0.0
    %592 = vmatprep.subr.mxu0 0.0
    %593 = vmatpush1.msra.mxu0 0.0
    %594 = vmatprep.subr.mxu0 0.0
    %595 = vmatpush1.msra.mxu0 0.0
    %596 = vmatprep.subr.mxu0 0.0
    %597 = vmatpush1.msra.mxu0 0.0
    %598 = vmatprep.subr.mxu0 0.0
    %599 = vmatpush1.msra.mxu0 0.0
    %600 = vmatprep.subr.mxu0 0.0
    %601 = vmatpush1.msra.mxu0 0.0
    %602 = vmatprep.subr.mxu0 0.0
    %603 = vmatpush1.msra.mxu0 0.0
    %604 = vmatprep.subr.mxu0 0.0
    %605 = vmatpush1.msra.mxu0 0.0
    %606 = vmatprep.subr.mxu0 0.0
    %607 = vmatpush1.msra.mxu0 0.0
    %608 = vmatprep.subr.mxu0 0.0
    %609 = vmatpush1.msra.mxu0 0.0
    %610 = vmatprep.mubr.f32.mxu0 0.0
    %611 = vmatmul.mubr.f32.gmra.mrb[0].mxu0 %v544
    %v612 = vpop.f32.mrb[0].mxu0
    %v613 = vadd.f32 0.0, %v612
    %v614 = vpop.f32.mrb[0].mxu0
    %615 = vdwg.mxu0
    %v616 = vadd.f32 %v540, %v613
    %v617 = vxor.u32 %v616, 2147483648
    %v618 = vmul.f32 %v617, 1.442695
    %v619 = vpow.pop %v618
    %v620 = vadd.f32 %v619, 1.0
    %v621 = vrcp.pop %v620
    %v622 = vmul.f32 1.0, %v621
    %v623 = vmul.f32 %v622, 2.0
    %v624 = vsub.f32 %v623, 1.0
    %v625 = vsel %vm188, %v624, %v622
    %v626 = vmul.f32 %v625, %v523
    %628 = vrot.lane.b32.xlu0 %v625, 64
    %v629 = vpop.permute.xlu0 %628
    %v631 = vmul.f32 %v625, %v629
    %633 = vrot.lane.b32.xlu0 %v631, 32
    %v634 = vpop.permute.xlu0 %633
    %v636 = vadd.f32 %v626, %v634
    %v637 = vtanh.pop %v636
    %639 = vrot.lane.b32.xlu0 %v637, 64
    %v640 = vpop.permute.xlu0 %639
    %v642 = vmul.f32 %v625, %v640
    %v643 = vmul.f32 %v642, %v302
    %645 = vrot.lane.b32.xlu0 %v643, 32
    %v646 = vpop.permute.xlu0 %645
    %v648 = vsel %vm195, %v646, 0.0
    %649 = vadd.xlane.f32.xlu0 %v648
    %v650 = vpop.xlane.xlu0 %649
    %vm651 = vcmp.eq.s32.totalorder %v185, 3
    %v652 = vsel %vm651, %v650, %v539
    %v653 = vld [vmem:[#allocation2 + $0x20] sm:$0xff]
    %655 = vrot.lane.b32.xlu0 %v642, 32
    %v656 = vpop.permute.xlu0 %655
    %v657 = vsel %vm195, %v656, 0
    %659 = vmatprep.subr.mxu0 0.0
    %660 = vmatpush1.msra.mxu0 %v189
    %661 = vmatprep.subr.mxu0 0.0
    %662 = vmatpush1.msra.mxu0 %v190
    %663 = vmatprep.subr.mxu0 0.0
    %664 = vmatpush1.msra.mxu0 %v191
    %665 = vmatprep.subr.mxu0 0.0
    %666 = vmatpush1.msra.mxu0 %v192
    %667 = vmatprep.subr.mxu0 0.0
    %668 = vmatpush1.msra.mxu0 0.0
    %669 = vmatprep.subr.mxu0 0.0
    %670 = vmatpush1.msra.mxu0 0.0
    %671 = vmatprep.subr.mxu0 0.0
    %672 = vmatpush1.msra.mxu0 0.0
    %673 = vmatprep.subr.mxu0 0.0
    %674 = vmatpush1.msra.mxu0 0.0
    %675 = vmatprep.subr.mxu0 0.0
    %676 = vmatpush1.msra.mxu0 0.0
    %677 = vmatprep.subr.mxu0 0.0
    %678 = vmatpush1.msra.mxu0 0.0
    %679 = vmatprep.subr.mxu0 0.0
    %680 = vmatpush1.msra.mxu0 0.0
    %681 = vmatprep.subr.mxu0 0.0
    %682 = vmatpush1.msra.mxu0 0.0
    %683 = vmatprep.subr.mxu0 0.0
    %684 = vmatpush1.msra.mxu0 0.0
    %685 = vmatprep.subr.mxu0 0.0
    %686 = vmatpush1.msra.mxu0 0.0
    %687 = vmatprep.subr.mxu0 0.0
    %688 = vmatpush1.msra.mxu0 0.0
    %689 = vmatprep.subr.mxu0 0.0
    %690 = vmatpush1.msra.mxu0 0.0
    %691 = vmatprep.subr.mxu0 0.0
    %692 = vmatpush1.msra.mxu0 0.0
    %693 = vmatprep.subr.mxu0 0.0
    %694 = vmatpush1.msra.mxu0 0.0
    %695 = vmatprep.subr.mxu0 0.0
    %696 = vmatpush1.msra.mxu0 0.0
    %697 = vmatprep.subr.mxu0 0.0
    %698 = vmatpush1.msra.mxu0 0.0
    %699 = vmatprep.subr.mxu0 0.0
    %700 = vmatpush1.msra.mxu0 0.0
    %701 = vmatprep.subr.mxu0 0.0
    %702 = vmatpush1.msra.mxu0 0.0
    %703 = vmatprep.subr.mxu0 0.0
    %704 = vmatpush1.msra.mxu0 0.0
    %705 = vmatprep.subr.mxu0 0.0
    %706 = vmatpush1.msra.mxu0 0.0
    %707 = vmatprep.subr.mxu0 0.0
    %708 = vmatpush1.msra.mxu0 0.0
    %709 = vmatprep.subr.mxu0 0.0
    %710 = vmatpush1.msra.mxu0 0.0
    %711 = vmatprep.subr.mxu0 0.0
    %712 = vmatpush1.msra.mxu0 0.0
    %713 = vmatprep.subr.mxu0 0.0
    %714 = vmatpush1.msra.mxu0 0.0
    %715 = vmatprep.subr.mxu0 0.0
    %716 = vmatpush1.msra.mxu0 0.0
    %717 = vmatprep.subr.mxu0 0.0
    %718 = vmatpush1.msra.mxu0 0.0
    %719 = vmatprep.subr.mxu0 0.0
    %720 = vmatpush1.msra.mxu0 0.0
    %721 = vmatprep.subr.mxu0 0.0
    %722 = vmatpush1.msra.mxu0 0.0
    %723 = vmatprep.mubr.f32.mxu0 0.0
    %724 = vmatmul.mubr.f32.gmra.mrb[0].mxu0 %v657
    %v725 = vpop.f32.mrb[0].mxu0
    %v726 = vadd.f32 0.0, %v725
    %v727 = vpop.f32.mrb[0].mxu0
    %728 = vdwg.mxu0
    %v729 = vadd.f32 %v653, %v726
    %v730 = vxor.u32 %v729, 2147483648
    %v731 = vmul.f32 %v730, 1.442695
    %v732 = vpow.pop %v731
    %v733 = vadd.f32 %v732, 1.0
    %v734 = vrcp.pop %v733
    %v735 = vmul.f32 1.0, %v734
    %v736 = vmul.f32 %v735, 2.0
    %v737 = vsub.f32 %v736, 1.0
    %v738 = vsel %vm188, %v737, %v735
    %v739 = vmul.f32 %v738, %v636
    %741 = vrot.lane.b32.xlu0 %v738, 64
    %v742 = vpop.permute.xlu0 %741
    %v744 = vmul.f32 %v738, %v742
    %746 = vrot.lane.b32.xlu0 %v744, 32
    %v747 = vpop.permute.xlu0 %746
    %v749 = vadd.f32 %v739, %v747
    %v750 = vtanh.pop %v749
    %752 = vrot.lane.b32.xlu0 %v750, 64
    %v753 = vpop.permute.xlu0 %752
    %v755 = vmul.f32 %v738, %v753
    %v756 = vmul.f32 %v755, %v302
    %758 = vrot.lane.b32.xlu0 %v756, 32
    %v759 = vpop.permute.xlu0 %758
    %v761 = vsel %vm195, %v759, 0.0
    %762 = vadd.xlane.f32.xlu0 %v761
    %v763 = vpop.xlane.xlu0 %762
    %vm764 = vcmp.eq.s32.totalorder %v185, 4
    %v765 = vsel %vm764, %v763, %v652
    %v766 = vld [vmem:[#allocation2 + $0x28] sm:$0xff]
    %768 = vrot.lane.b32.xlu0 %v755, 32
    %v769 = vpop.permute.xlu0 %768
    %v770 = vsel %vm195, %v769, 0
    %772 = vmatprep.subr.mxu0 0.0
    %773 = vmatpush1.msra.mxu0 %v189
    %774 = vmatprep.subr.mxu0 0.0
    %775 = vmatpush1.msra.mxu0 %v190
    %776 = vmatprep.subr.mxu0 0.0
    %777 = vmatpush1.msra.mxu0 %v191
    %778 = vmatprep.subr.mxu0 0.0
    %779 = vmatpush1.msra.mxu0 %v192
    %780 = vmatprep.subr.mxu0 0.0
    %781 = vmatpush1.msra.mxu0 0.0
    %782 = vmatprep.subr.mxu0 0.0
    %783 = vmatpush1.msra.mxu0 0.0
    %784 = vmatprep.subr.mxu0 0.0
    %785 = vmatpush1.msra.mxu0 0.0
    %786 = vmatprep.subr.mxu0 0.0
    %787 = vmatpush1.msra.mxu0 0.0
    %788 = vmatprep.subr.mxu0 0.0
    %789 = vmatpush1.msra.mxu0 0.0
    %790 = vmatprep.subr.mxu0 0.0
    %791 = vmatpush1.msra.mxu0 0.0
    %792 = vmatprep.subr.mxu0 0.0
    %793 = vmatpush1.msra.mxu0 0.0
    %794 = vmatprep.subr.mxu0 0.0
    %795 = vmatpush1.msra.mxu0 0.0
    %796 = vmatprep.subr.mxu0 0.0
    %797 = vmatpush1.msra.mxu0 0.0
    %798 = vmatprep.subr.mxu0 0.0
    %799 = vmatpush1.msra.mxu0 0.0
    %800 = vmatprep.subr.mxu0 0.0
    %801 = vmatpush1.msra.mxu0 0.0
    %802 = vmatprep.subr.mxu0 0.0
    %803 = vmatpush1.msra.mxu0 0.0
    %804 = vmatprep.subr.mxu0 0.0
    %805 = vmatpush1.msra.mxu0 0.0
    %806 = vmatprep.subr.mxu0 0.0
    %807 = vmatpush1.msra.mxu0 0.0
    %808 = vmatprep.subr.mxu0 0.0
    %809 = vmatpush1.msra.mxu0 0.0
    %810 = vmatprep.subr.mxu0 0.0
    %811 = vmatpush1.msra.mxu0 0.0
    %812 = vmatprep.subr.mxu0 0.0
    %813 = vmatpush1.msra.mxu0 0.0
    %814 = vmatprep.subr.mxu0 0.0
    %815 = vmatpush1.msra.mxu0 0.0
    %816 = vmatprep.subr.mxu0 0.0
    %817 = vmatpush1.msra.mxu0 0.0
    %818 = vmatprep.subr.mxu0 0.0
    %819 = vmatpush1.msra.mxu0 0.0
    %820 = vmatprep.subr.mxu0 0.0
    %821 = vmatpush1.msra.mxu0 0.0
    %822 = vmatprep.subr.mxu0 0.0
    %823 = vmatpush1.msra.mxu0 0.0
    %824 = vmatprep.subr.mxu0 0.0
    %825 = vmatpush1.msra.mxu0 0.0
    %826 = vmatprep.subr.mxu0 0.0
    %827 = vmatpush1.msra.mxu0 0.0
    %828 = vmatprep.subr.mxu0 0.0
    %829 = vmatpush1.msra.mxu0 0.0
    %830 = vmatprep.subr.mxu0 0.0
    %831 = vmatpush1.msra.mxu0 0.0
    %832 = vmatprep.subr.mxu0 0.0
    %833 = vmatpush1.msra.mxu0 0.0
    %834 = vmatprep.subr.mxu0 0.0
    %835 = vmatpush1.msra.mxu0 0.0
    %836 = vmatprep.mubr.f32.mxu0 0.0
    %837 = vmatmul.mubr.f32.gmra.mrb[0].mxu0 %v770
    %v838 = vpop.f32.mrb[0].mxu0
    %v839 = vadd.f32 0.0, %v838
    %v840 = vpop.f32.mrb[0].mxu0
    %841 = vdwg.mxu0
    %v842 = vadd.f32 %v766, %v839
    %v843 = vxor.u32 %v842, 2147483648
    %v844 = vmul.f32 %v843, 1.442695
    %v845 = vpow.pop %v844
    %v846 = vadd.f32 %v845, 1.0
    %v847 = vrcp.pop %v846
    %v848 = vmul.f32 1.0, %v847
    %v849 = vmul.f32 %v848, 2.0
    %v850 = vsub.f32 %v849, 1.0
    %v851 = vsel %vm188, %v850, %v848
    %v852 = vmul.f32 %v851, %v749
    %854 = vrot.lane.b32.xlu0 %v851, 64
    %v855 = vpop.permute.xlu0 %854
    %v857 = vmul.f32 %v851, %v855
    %859 = vrot.lane.b32.xlu0 %v857, 32
    %v860 = vpop.permute.xlu0 %859
    %v862 = vadd.f32 %v852, %v860
    %v863 = vtanh.pop %v862
    %865 = vrot.lane.b32.xlu0 %v863, 64
    %v866 = vpop.permute.xlu0 %865
    %v868 = vmul.f32 %v851, %v866
    %v869 = vmul.f32 %v868, %v302
    %871 = vrot.lane.b32.xlu0 %v869, 32
    %v872 = vpop.permute.xlu0 %871
    %v874 = vsel %vm195, %v872, 0.0
    %875 = vadd.xlane.f32.xlu0 %v874
    %v876 = vpop.xlane.xlu0 %875
    %vm877 = vcmp.eq.s32.totalorder %v185, 5
    %v878 = vsel %vm877, %v876, %v765
    %v879 = vld [vmem:[#allocation2 + $0x30] sm:$0xff]
    %881 = vrot.lane.b32.xlu0 %v868, 32
    %v882 = vpop.permute.xlu0 %881
    %v883 = vsel %vm195, %v882, 0
    %885 = vmatprep.subr.mxu0 0.0
    %886 = vmatpush1.msra.mxu0 %v189
    %887 = vmatprep.subr.mxu0 0.0
    %888 = vmatpush1.msra.mxu0 %v190
    %889 = vmatprep.subr.mxu0 0.0
    %890 = vmatpush1.msra.mxu0 %v191
    %891 = vmatprep.subr.mxu0 0.0
    %892 = vmatpush1.msra.mxu0 %v192
    %893 = vmatprep.subr.mxu0 0.0
    %894 = vmatpush1.msra.mxu0 0.0
    %895 = vmatprep.subr.mxu0 0.0
    %896 = vmatpush1.msra.mxu0 0.0
    %897 = vmatprep.subr.mxu0 0.0
    %898 = vmatpush1.msra.mxu0 0.0
    %899 = vmatprep.subr.mxu0 0.0
    %900 = vmatpush1.msra.mxu0 0.0
    %901 = vmatprep.subr.mxu0 0.0
    %902 = vmatpush1.msra.mxu0 0.0
    %903 = vmatprep.subr.mxu0 0.0
    %904 = vmatpush1.msra.mxu0 0.0
    %905 = vmatprep.subr.mxu0 0.0
    %906 = vmatpush1.msra.mxu0 0.0
    %907 = vmatprep.subr.mxu0 0.0
    %908 = vmatpush1.msra.mxu0 0.0
    %909 = vmatprep.subr.mxu0 0.0
    %910 = vmatpush1.msra.mxu0 0.0
    %911 = vmatprep.subr.mxu0 0.0
    %912 = vmatpush1.msra.mxu0 0.0
    %913 = vmatprep.subr.mxu0 0.0
    %914 = vmatpush1.msra.mxu0 0.0
    %915 = vmatprep.subr.mxu0 0.0
    %916 = vmatpush1.msra.mxu0 0.0
    %917 = vmatprep.subr.mxu0 0.0
    %918 = vmatpush1.msra.mxu0 0.0
    %919 = vmatprep.subr.mxu0 0.0
    %920 = vmatpush1.msra.mxu0 0.0
    %921 = vmatprep.subr.mxu0 0.0
    %922 = vmatpush1.msra.mxu0 0.0
    %923 = vmatprep.subr.mxu0 0.0
    %924 = vmatpush1.msra.mxu0 0.0
    %925 = vmatprep.subr.mxu0 0.0
    %926 = vmatpush1.msra.mxu0 0.0
    %927 = vmatprep.subr.mxu0 0.0
    %928 = vmatpush1.msra.mxu0 0.0
    %929 = vmatprep.subr.mxu0 0.0
    %930 = vmatpush1.msra.mxu0 0.0
    %931 = vmatprep.subr.mxu0 0.0
    %932 = vmatpush1.msra.mxu0 0.0
    %933 = vmatprep.subr.mxu0 0.0
    %934 = vmatpush1.msra.mxu0 0.0
    %935 = vmatprep.subr.mxu0 0.0
    %936 = vmatpush1.msra.mxu0 0.0
    %937 = vmatprep.subr.mxu0 0.0
    %938 = vmatpush1.msra.mxu0 0.0
    %939 = vmatprep.subr.mxu0 0.0
    %940 = vmatpush1.msra.mxu0 0.0
    %941 = vmatprep.subr.mxu0 0.0
    %942 = vmatpush1.msra.mxu0 0.0
    %943 = vmatprep.subr.mxu0 0.0
    %944 = vmatpush1.msra.mxu0 0.0
    %945 = vmatprep.subr.mxu0 0.0
    %946 = vmatpush1.msra.mxu0 0.0
    %947 = vmatprep.subr.mxu0 0.0
    %948 = vmatpush1.msra.mxu0 0.0
    %949 = vmatprep.mubr.f32.mxu0 0.0
    %950 = vmatmul.mubr.f32.gmra.mrb[0].mxu0 %v883
    %v951 = vpop.f32.mrb[0].mxu0
    %v952 = vadd.f32 0.0, %v951
    %v953 = vpop.f32.mrb[0].mxu0
    %954 = vdwg.mxu0
    %v955 = vadd.f32 %v879, %v952
    %v956 = vxor.u32 %v955, 2147483648
    %v957 = vmul.f32 %v956, 1.442695
    %v958 = vpow.pop %v957
    %v959 = vadd.f32 %v958, 1.0
    %v960 = vrcp.pop %v959
    %v961 = vmul.f32 1.0, %v960
    %v962 = vmul.f32 %v961, 2.0
    %v963 = vsub.f32 %v962, 1.0
    %v964 = vsel %vm188, %v963, %v961
    %v965 = vmul.f32 %v964, %v862
    %967 = vrot.lane.b32.xlu0 %v964, 64
    %v968 = vpop.permute.xlu0 %967
    %v970 = vmul.f32 %v964, %v968
    %972 = vrot.lane.b32.xlu0 %v970, 32
    %v973 = vpop.permute.xlu0 %972
    %v975 = vadd.f32 %v965, %v973
    %v976 = vtanh.pop %v975
    %978 = vrot.lane.b32.xlu0 %v976, 64
    %v979 = vpop.permute.xlu0 %978
    %v981 = vmul.f32 %v964, %v979
    %v982 = vmul.f32 %v981, %v302
    %984 = vrot.lane.b32.xlu0 %v982, 32
    %v985 = vpop.permute.xlu0 %984
    %v987 = vsel %vm195, %v985, 0.0
    %988 = vadd.xlane.f32.xlu0 %v987
    %v989 = vpop.xlane.xlu0 %988
    %vm990 = vcmp.eq.s32.totalorder %v185, 6
    %v991 = vsel %vm990, %v989, %v878
    %v992 = vld [vmem:[#allocation2 + $0x38] sm:$0xff]
    %994 = vrot.lane.b32.xlu0 %v981, 32
    %v995 = vpop.permute.xlu0 %994
    %v996 = vsel %vm195, %v995, 0
    %998 = vmatprep.subr.mxu0 0.0
    %999 = vmatpush1.msra.mxu0 %v189
    %1000 = vmatprep.subr.mxu0 0.0
    %1001 = vmatpush1.msra.mxu0 %v190
    %1002 = vmatprep.subr.mxu0 0.0
    %1003 = vmatpush1.msra.mxu0 %v191
    %1004 = vmatprep.subr.mxu0 0.0
    %1005 = vmatpush1.msra.mxu0 %v192
    %1006 = vmatprep.subr.mxu0 0.0
    %1007 = vmatpush1.msra.mxu0 0.0
    %1008 = vmatprep.subr.mxu0 0.0
    %1009 = vmatpush1.msra.mxu0 0.0
    %1010 = vmatprep.subr.mxu0 0.0
    %1011 = vmatpush1.msra.mxu0 0.0
    %1012 = vmatprep.subr.mxu0 0.0
    %1013 = vmatpush1.msra.mxu0 0.0
    %1014 = vmatprep.subr.mxu0 0.0
    %1015 = vmatpush1.msra.mxu0 0.0
    %1016 = vmatprep.subr.mxu0 0.0
    %1017 = vmatpush1.msra.mxu0 0.0
    %1018 = vmatprep.subr.mxu0 0.0
    %1019 = vmatpush1.msra.mxu0 0.0
    %1020 = vmatprep.subr.mxu0 0.0
    %1021 = vmatpush1.msra.mxu0 0.0
    %1022 = vmatprep.subr.mxu0 0.0
    %1023 = vmatpush1.msra.mxu0 0.0
    %1024 = vmatprep.subr.mxu0 0.0
    %1025 = vmatpush1.msra.mxu0 0.0
    %1026 = vmatprep.subr.mxu0 0.0
    %1027 = vmatpush1.msra.mxu0 0.0
    %1028 = vmatprep.subr.mxu0 0.0
    %1029 = vmatpush1.msra.mxu0 0.0
    %1030 = vmatprep.subr.mxu0 0.0
    %1031 = vmatpush1.msra.mxu0 0.0
    %1032 = vmatprep.subr.mxu0 0.0
    %1033 = vmatpush1.msra.mxu0 0.0
    %1034 = vmatprep.subr.mxu0 0.0
    %1035 = vmatpush1.msra.mxu0 0.0
    %1036 = vmatprep.subr.mxu0 0.0
    %1037 = vmatpush1.msra.mxu0 0.0
    %1038 = vmatprep.subr.mxu0 0.0
    %1039 = vmatpush1.msra.mxu0 0.0
    %1040 = vmatprep.subr.mxu0 0.0
    %1041 = vmatpush1.msra.mxu0 0.0
    %1042 = vmatprep.subr.mxu0 0.0
    %1043 = vmatpush1.msra.mxu0 0.0
    %1044 = vmatprep.subr.mxu0 0.0
    %1045 = vmatpush1.msra.mxu0 0.0
    %1046 = vmatprep.subr.mxu0 0.0
    %1047 = vmatpush1.msra.mxu0 0.0
    %1048 = vmatprep.subr.mxu0 0.0
    %1049 = vmatpush1.msra.mxu0 0.0
    %1050 = vmatprep.subr.mxu0 0.0
    %1051 = vmatpush1.msra.mxu0 0.0
    %1052 = vmatprep.subr.mxu0 0.0
    %1053 = vmatpush1.msra.mxu0 0.0
    %1054 = vmatprep.subr.mxu0 0.0
    %1055 = vmatpush1.msra.mxu0 0.0
    %1056 = vmatprep.subr.mxu0 0.0
    %1057 = vmatpush1.msra.mxu0 0.0
    %1058 = vmatprep.subr.mxu0 0.0
    %1059 = vmatpush1.msra.mxu0 0.0
    %1060 = vmatprep.subr.mxu0 0.0
    %1061 = vmatpush1.msra.mxu0 0.0
    %1062 = vmatprep.mubr.f32.mxu0 0.0
    %1063 = vmatmul.mubr.f32.gmra.mrb[0].mxu0 %v996
    %v1064 = vpop.f32.mrb[0].mxu0
    %v1065 = vadd.f32 0.0, %v1064
    %v1066 = vpop.f32.mrb[0].mxu0
    %1067 = vdwg.mxu0
    %v1068 = vadd.f32 %v992, %v1065
    %v1069 = vxor.u32 %v1068, 2147483648
    %v1070 = vmul.f32 %v1069, 1.442695
    %v1071 = vpow.pop %v1070
    %v1072 = vadd.f32 %v1071, 1.0
    %v1073 = vrcp.pop %v1072
    %v1074 = vmul.f32 1.0, %v1073
    %v1075 = vmul.f32 %v1074, 2.0
    %v1076 = vsub.f32 %v1075, 1.0
    %v1077 = vsel %vm188, %v1076, %v1074
    %v1078 = vmul.f32 %v1077, %v975
    %1080 = vrot.lane.b32.xlu0 %v1077, 64
    %v1081 = vpop.permute.xlu0 %1080
    %v1083 = vmul.f32 %v1077, %v1081
    %1085 = vrot.lane.b32.xlu0 %v1083, 32
    %v1086 = vpop.permute.xlu0 %1085
    %v1088 = vadd.f32 %v1078, %v1086
    %v1089 = vtanh.pop %v1088
    %1091 = vrot.lane.b32.xlu0 %v1089, 64
    %v1092 = vpop.permute.xlu0 %1091
    %v1094 = vmul.f32 %v1077, %v1092
    %v1095 = vmul.f32 %v1094, %v302
    %1097 = vrot.lane.b32.xlu0 %v1095, 32
    %v1098 = vpop.permute.xlu0 %1097
    %v1100 = vsel %vm195, %v1098, 0.0
    %1101 = vadd.xlane.f32.xlu0 %v1100
    %v1102 = vpop.xlane.xlu0 %1101
    %vm1103 = vcmp.eq.s32.totalorder %v185, 7
    %v1104 = vsel %vm1103, %v1102, %v991
    %v1105 = vld [vmem:[#allocation3] sm:$0x1]
    %v1107 = vlaneseq
    %v1108 = vshrl.u32 %v1107, 7
    %v1109 = vsub.s32 0, %v1108
    %v1110 = vrot.slane %v1105, %v1109
    %1111 = vset.pattern.permute.xlu0 0
    %1112 = vperm.xlu0 %1111, %v1110
    %v1113 = vpop.permute.xlu0 %1112
    %v1115 = vadd.f32 %v1104, %v1113
    %vm1116 = vcmask 64512
    %1117 = vst.msk [vmem:[#allocation4] sm:$0xff] %vm1116, %v1115
    // Predicated region
    $region26: #{tpu_custom_call.1} parent=1 // pred_check
      _
    $region27: #{tpu_custom_call.1} parent=1 // pred_check_branch
      %1119 = sbr.rel (0) target = $region29
    $region28: #{tpu_custom_call.1} parent=1 // pred_region
      %s1121 = ssub.s32 128, 128
      %1122 = vsyncadd [#allocation5], %s1121
      %s1124 = sshll.u32 [#allocation4], 4
      %s1125 = int_to_ptr.vmem [resolvable:$true] %s1124
      %1127 = dma.vmem_to_hbm [thread:$0]  %s1125, 128, %s6, [#allocation5]
    $region29: #{tpu_custom_call.1} parent=1 // pred_fallthru
      _
    // Predicated region
    $region30: #{tpu_custom_call.1} parent=1 // pred_check
      _
    $region31: #{tpu_custom_call.1} parent=1 // pred_check_branch
      %1129 = sbr.rel (0) target = $region33
    $region32: #{tpu_custom_call.1} parent=1 // pred_region
      %1130 = dma.done [#allocation5], 128
    $region33: #{tpu_custom_call.1} parent=1 // pred_fallthru
      _
    %1131 = vsyncpa [#allocation5], 1

</llo_original>
